<compile_context>
chip_gen: v6e
topology: v6e:2x2x1
jax: 0.10.0
libtpu: 0.0.40
codegen_flags: <defaults>
</compile_context>

<pallas_src>
import math
from typing import NamedTuple

import jax
import jax.numpy as jnp
from jax.experimental import pallas as pl
from jax.experimental.pallas import tpu as pltpu


# --------------------------------------------------------------------------- #
# Kernel
# --------------------------------------------------------------------------- #
def qnet_kernel(x_ref, w1_ref, b1_ref, w2_ref, b2_ref, w3_ref, b3_ref,
                g_ref, gt_ref, o_ref):
    mm_dtype = w1_ref.dtype

    # ---- 3-layer MLP: all matmuls on the MXU, f32 accumulation ---- #
    x = x_ref[...]
    h1 = jnp.dot(x, w1_ref[...], preferred_element_type=jnp.float32) + b1_ref[...]
    h1 = jnp.maximum(h1, 0.0)                       # f32 elementwise (v5e-safe)

    h2 = jnp.dot(h1.astype(mm_dtype), w2_ref[...],
                 preferred_element_type=jnp.float32) + b2_ref[...]
    h2 = jnp.maximum(h2, 0.0)

    z = jnp.dot(h2.astype(mm_dtype), w3_ref[...],
                preferred_element_type=jnp.float32) + b3_ref[...]

    # ---- Lane-dense grouped softmax over each atom block ---- #
    # Row-wide max is valid for stability (same constant inside every group);
    # padded lanes carry a -1e30 bias so they never set the max.  Clamping the
    # exponent at -80 keeps every exp() > 0, so no group denominator can hit 0.
    m = jnp.max(z, axis=-1, keepdims=True)
    e = jnp.exp(jnp.maximum(z - m, -80.0))          # EUP, values in (1.8e-35, 1]

    # Per-group denominators via a thin group-indicator matmul (TB, Gp).
    denom = jnp.dot(e.astype(mm_dtype), g_ref[...],
                    preferred_element_type=jnp.float32)
    # Floor keeps empty/padded group columns finite (real groups are >= ~2e-35).
    denom = jnp.maximum(denom, 1e-37)
    # Approx reciprocal on the EUP (free slot) + one Newton-Raphson refinement.
    r = pl.reciprocal(denom, approx=True)
    r = r * (2.0 - denom * r)
    # Expand compact reciprocals back to per-lane values with G^T (MXU).
    r_full = jnp.dot(r.astype(mm_dtype), gt_ref[...],
                     preferred_element_type=jnp.float32)

    # Single full-width, lane-dense store.
    o_ref[...] = (e * r_full).astype(o_ref.dtype)


# --------------------------------------------------------------------------- #
# Parameter preparation (hoisted out of the per-call hot path)
# --------------------------------------------------------------------------- #
def _round_up(n, m):
    return ((n + m - 1) // m) * m


def _nbytes(shape, dtype):
    return math.prod(shape) * jnp.dtype(dtype).itemsize


class QNetPrepared(NamedTuple):
    w1: jax.Array
    b1: jax.Array
    w2: jax.Array
    b2: jax.Array
    w3: jax.Array
    b3: jax.Array
    g: jax.Array          # (OAp, Gp) thin group-indicator matrix
    gt: jax.Array         # (Gp, OAp) its transpose
    input_nums: int
    hidden_nums: int
    output_nums: int
    atom_nums: int


def prepare_params(params, output_nums, atom_nums, *,
                   matmul_dtype=jnp.bfloat16):
    """Pad/cast weights and build the thin softmax-group matrices ONCE."""
    w1, b1, w2, b2, w3, b3 = params
    K, H = w1.shape
    OA = output_nums * atom_nums
    LANE = 128
    Kp, Hp, OAp = _round_up(K, LANE), _round_up(H, LANE), _round_up(OA, LANE)
    Gp = _round_up(output_nums, LANE)
    f32 = jnp.float32

    def pad2(a, rows, cols, fill=0.0):
        a = jnp.asarray(a)
        return jnp.pad(a, ((0, rows - a.shape[0]), (0, cols - a.shape[1])),
                       constant_values=fill)

    # Zero padding is mathematically inert: padded hidden units are ReLU(0)=0
    # and feed zero weights; padded output lanes are sliced off by the wrapper.
    w1p = pad2(w1, Kp, Hp).astype(matmul_dtype)
    w2p = pad2(w2, Hp, Hp).astype(matmul_dtype)
    w3p = pad2(w3, Hp, OAp).astype(matmul_dtype)
    b1p = pad2(jnp.asarray(b1, f32).reshape(1, -1), 1, Hp)
    b2p = pad2(jnp.asarray(b2, f32).reshape(1, -1), 1, Hp)
    # Padded output lanes get a huge negative bias so they never win the
    # row-wide max used to stabilize the softmax.
    b3p = pad2(jnp.asarray(b3, f32).reshape(1, -1), 1, OAp, fill=-1e30)

    # Thin group-indicator matrix: g[l, c] = 1 iff lane l belongs to action c.
    # Padded lanes (l >= OA) belong to no group (zero rows -> zero output);
    # padded group columns (c >= output_nums) are all-zero and neutralized by
    # the denom floor in the kernel.
    lane = jnp.arange(OAp)
    grp = jnp.where(lane < OA, lane // atom_nums, Gp)       # Gp == "no group"
    g = (grp[:, None] == jnp.arange(Gp)[None, :]).astype(matmul_dtype)
    gt = jnp.asarray(g.T)

    return QNetPrepared(w1p, b1p, w2p, b2p, w3p, b3p, g, gt,
                        K, H, output_nums, atom_nums)


def _vmem_cap_bytes():
    """Generation-aware VMEM request cap: phys - 8 MiB, never above 100 MiB."""
    phys = 64 << 20  # conservative default (v7x per-TensorCore VMEM)
    try:
        info = pltpu.get_tpu_info()
        phys = int(getattr(info, "vmem_capacity_bytes", phys))
    except Exception:
        pass
    return int(max(min(phys - (8 << 20), 100 << 20), 16 << 20))


# --------------------------------------------------------------------------- #
# Forward wrapper
# --------------------------------------------------------------------------- #
def qnet_forward(x, prep: QNetPrepared, *, batch_tile=256,
                 out_dtype=jnp.float32):
    """Pallas forward pass matching QNet.forward (returns (B, O, A) probs)."""
    B, K = x.shape
    assert K == prep.input_nums, "input feature dim mismatch"
    mm_dtype = prep.w1.dtype
    Kp, Hp = prep.w1.shape
    OAp = prep.w3.shape[1]
    Gp = prep.g.shape[1]
    OA = prep.output_nums * prep.atom_nums
    f32 = jnp.float32

    # Sublane granularity: 16 if any streamed operand is 16-bit packed.
    min_itemsize = min(jnp.dtype(mm_dtype).itemsize, jnp.dtype(out_dtype).itemsize)
    SUB = 8 if min_itemsize >= 4 else 16

    # Batch tiling: multiple of SUB sublanes; aim for >= 2 grid steps when the
    # batch allows so v7x's two TensorCores both get work and x/out DMA overlaps
    # compute; cap at batch_tile (256 default amortizes ~0.35us/step overhead).
    tb_cap = _round_up(max(int(batch_tile), SUB), SUB)
    Bp0 = _round_up(B, SUB)
    TB = min(tb_cap, max(SUB, _round_up(Bp0 // 2, SUB)))
    Bp = _round_up(Bp0, TB)
    grid = (Bp // TB,)

    xp = jnp.pad(x, ((0, Bp - B), (0, Kp - K))).astype(mm_dtype)

    # ---- VMEM budget (resident weights/biases/G + streamed x/out + live) ---- #
    resident = (_nbytes((Kp, Hp), mm_dtype) + _nbytes((Hp, Hp), mm_dtype)
                + _nbytes((Hp, OAp), mm_dtype)
                + 2 * _nbytes((1, Hp), f32) + _nbytes((1, OAp), f32)
                + _nbytes((OAp, Gp), mm_dtype) + _nbytes((Gp, OAp), mm_dtype))
    streamed = _nbytes((TB, Kp), mm_dtype) + _nbytes((TB, OAp), out_dtype)
    live = (2 * _nbytes((TB, Hp), f32) + 3 * _nbytes((TB, OAp), f32)
            + 2 * _nbytes((TB, Gp), f32))
    headroom = 2 << 20
    cap = _vmem_cap_bytes()
    # TODO(synk): if `2*resident` ever exceeds ~40 MiB on v7x (very large
    # hidden_nums), add a K-reduction grid axis over Hp for w2/w3 with an f32
    # accumulator scratch + pl.when init/finalize instead of full residency.

    # ---- Cost estimate so XLA can schedule surrounding ops ---- #
    flops = 2 * Bp * (Kp * Hp + Hp * Hp + Hp * OAp + 2 * OAp * Gp)
    transcendentals = Bp * (OAp + Gp)
    bytes_accessed = int(
        _nbytes((Bp, Kp), mm_dtype) + resident + _nbytes((Bp, OAp), out_dtype))
    cost = pl.CostEstimate(flops=int(flops),
                           transcendentals=int(transcendentals),
                           bytes_accessed=bytes_accessed)

    args = (xp, prep.w1, prep.b1, prep.w2, prep.b2, prep.w3, prep.b3,
            prep.g, prep.gt)

    def build(single_buffer_resident):
        mult = 1 if single_buffer_resident else 2
        vmem_bytes = int(min(max(mult * resident + 2 * streamed + live
                                 + headroom, 8 << 20), cap))
        pm = pl.Buffered(1) if single_buffer_resident else None

        def resident_spec(shape):
            n = len(shape)
            imap = (lambda i, _n=n: (0,) * _n)
            if pm is None:
                return pl.BlockSpec(shape, imap)
            return pl.BlockSpec(shape, imap, pipeline_mode=pm)

        return pl.pallas_call(
            qnet_kernel,
            out_shape=jax.ShapeDtypeStruct((Bp, OAp), out_dtype),
            grid=grid,
            in_specs=[
                pl.BlockSpec((TB, Kp), lambda i: (i, 0)),   # x: streamed tiles
                resident_spec(prep.w1.shape), resident_spec(prep.b1.shape),
                resident_spec(prep.w2.shape), resident_spec(prep.b2.shape),
                resident_spec(prep.w3.shape), resident_spec(prep.b3.shape),
                resident_spec(prep.g.shape), resident_spec(prep.gt.shape),
            ],
            out_specs=pl.BlockSpec((TB, OAp), lambda i: (i, 0)),
            compiler_params=pltpu.CompilerParams(
                dimension_semantics=("parallel",),
                vmem_limit_bytes=vmem_bytes),
            cost_estimate=cost,
        )

    try:
        # Single-buffer the never-changing resident operands (constant index
        # maps): halves their VMEM footprint (matters most on v7x's 64 MiB).
        out_padded = build(True)(*args)
    except Exception:
        # pipeline_mode=pl.Buffered(1) not supported by this jax/libtpu combo:
        # fall back to the default double-buffered resident specs.
        out_padded = build(False)(*args)

    # Strip padding; match PyTorch's out.view(-1, output_nums, atom_nums).
    return out_padded[:B, :OA].reshape(B, prep.output_nums, prep.atom_nums)


# --------------------------------------------------------------------------- #
# Params / reference
# --------------------------------------------------------------------------- #
def init_params(key, input_nums, hidden_nums, output_nums, atom_nums):
    """xavier_uniform_ weights (gain=1, stored transposed) and zero biases."""
    def xavier(k, fan_in, fan_out):
        bound = math.sqrt(6.0 / (fan_in + fan_out))
        return jax.random.uniform(k, (fan_in, fan_out), jnp.float32,
                                  -bound, bound)

    k1, k2, k3 = jax.random.split(key, 3)
    w1 = xavier(k1, input_nums, hidden_nums)
    b1 = jnp.zeros((1, hidden_nums), jnp.float32)
    w2 = xavier(k2, hidden_nums, hidden_nums)
    b2 = jnp.zeros((1, hidden_nums), jnp.float32)
    w3 = xavier(k3, hidden_nums, output_nums * atom_nums)
    b3 = jnp.zeros((1, output_nums * atom_nums), jnp.float32)
    return (w1, b1, w2, b2, w3, b3)


def qnet_reference(x, params, output_nums, atom_nums):
    """Pure-JAX reference mirroring the PyTorch forward."""
    w1, b1, w2, b2, w3, b3 = params
    h = jnp.maximum(x @ w1 + b1, 0.0)
    h = jnp.maximum(h @ w2 + b2, 0.0)
    z = (h @ w3 + b3).reshape(-1, output_nums, atom_nums)
    return jax.nn.softmax(z, axis=2)


# --------------------------------------------------------------------------- #
# Demo / self-test
# --------------------------------------------------------------------------- #
if __name__ == "__main__":
    batch = 2
    input_nums = 16
    hidden_nums = 32
    output_nums = 4
    atom_nums = 8

    key = jax.random.PRNGKey(0)
    kx, kp = jax.random.split(key)
    x = jax.random.normal(kx, (batch, input_nums), dtype=jnp.float32)
    params = init_params(kp, input_nums, hidden_nums, output_nums, atom_nums)

    p_ref = qnet_reference(x, params, output_nums, atom_nums)

    # Default path: bf16 matmuls (MXU-native on v5e/v6e/v7x), f32 elementwise.
    prep_bf16 = prepare_params(params, output_nums, atom_nums)
    p = jax.block_until_ready(qnet_forward(x, prep_bf16))
    assert p.shape == (batch, output_nums, atom_nums)
    assert jnp.allclose(p, p_ref, atol=2e-2, rtol=2e-2), "bf16 mismatch vs ref"
    assert jnp.allclose(jnp.sum(p, axis=2), 1.0, atol=2e-2), "bf16 probs != 1"

    # Exact-parity path: f32 matmuls end to end.
    prep_f32 = prepare_params(params, output_nums, atom_nums,
                              matmul_dtype=jnp.float32)
    p32 = jax.block_until_ready(qnet_forward(x, prep_f32))
    assert jnp.allclose(p32, p_ref, atol=1e-4, rtol=1e-4), "f32 mismatch vs ref"
    assert jnp.allclose(jnp.sum(p32, axis=2), 1.0, atol=1e-4), "f32 probs != 1"

    # Optional bf16 output (halves output store/DMA bytes).
    pb = jax.block_until_ready(
        qnet_forward(x, prep_bf16, out_dtype=jnp.bfloat16))
    assert pb.dtype == jnp.bfloat16
    assert jnp.allclose(pb.astype(jnp.float32), p_ref, atol=3e-2, rtol=3e-2)
    assert jnp.allclose(jnp.sum(pb.astype(jnp.float32), axis=2), 1.0, atol=2e-2)

    print("KERNEL_OK")
</pallas_src>

<mosaic_0001>
module attributes {stable_mosaic.version = 11 : i64} {
  func.func @qnet_kernel(%arg0: i32, %arg1: memref<16x128xbf16, #tpu.memory_space<vmem>>, %arg2: memref<128x128xbf16, #tpu.memory_space<vmem>>, %arg3: memref<1x128xf32, #tpu.memory_space<vmem>>, %arg4: memref<128x128xbf16, #tpu.memory_space<vmem>>, %arg5: memref<1x128xf32, #tpu.memory_space<vmem>>, %arg6: memref<128x128xbf16, #tpu.memory_space<vmem>>, %arg7: memref<1x128xf32, #tpu.memory_space<vmem>>, %arg8: memref<128x128xbf16, #tpu.memory_space<vmem>>, %arg9: memref<128x128xbf16, #tpu.memory_space<vmem>>, %arg10: memref<16x128xf32, #tpu.memory_space<vmem>>) attributes {dimension_semantics = [#tpu.dimension_semantics<parallel>], iteration_bounds = array<i64: 1>, scalar_prefetch = 0 : i64, scratch_operands = 0 : i64, tpu.core_type = #tpu.core_type<tc>, window_params = [{transform_indices = @transform_0, window_bounds = array<i64: 16, 128>}, {pipeline_mode = #tpu.pipeline_mode<synchronous>, transform_indices = @transform_1, window_bounds = array<i64: 128, 128>}, {pipeline_mode = #tpu.pipeline_mode<synchronous>, transform_indices = @transform_2, window_bounds = array<i64: 1, 128>}, {pipeline_mode = #tpu.pipeline_mode<synchronous>, transform_indices = @transform_3, window_bounds = array<i64: 128, 128>}, {pipeline_mode = #tpu.pipeline_mode<synchronous>, transform_indices = @transform_4, window_bounds = array<i64: 1, 128>}, {pipeline_mode = #tpu.pipeline_mode<synchronous>, transform_indices = @transform_5, window_bounds = array<i64: 128, 128>}, {pipeline_mode = #tpu.pipeline_mode<synchronous>, transform_indices = @transform_6, window_bounds = array<i64: 1, 128>}, {pipeline_mode = #tpu.pipeline_mode<synchronous>, transform_indices = @transform_7, window_bounds = array<i64: 128, 128>}, {pipeline_mode = #tpu.pipeline_mode<synchronous>, transform_indices = @transform_8, window_bounds = array<i64: 128, 128>}, {transform_indices = @transform_9, window_bounds = array<i64: 16, 128>}]} {
    %c0 = arith.constant 0 : index
    %c0_0 = arith.constant 0 : index
    %0 = vector.load %arg1[%c0, %c0_0] : memref<16x128xbf16, #tpu.memory_space<vmem>>, vector<16x128xbf16>
    %c0_1 = arith.constant 0 : index
    %c0_2 = arith.constant 0 : index
    %1 = vector.load %arg2[%c0_1, %c0_2] : memref<128x128xbf16, #tpu.memory_space<vmem>>, vector<128x128xbf16>
    %cst = arith.constant dense<0.000000e+00> : vector<16x128xf32>
    %2 = tpu.matmul %0, %1, %cst {dimension_numbers = #tpu.dot_dimension_numbers<[1], [0], [0], [1], [0, 0, 1, 1], [], []>} : vector<16x128xbf16>, vector<128x128xbf16>, vector<16x128xf32> -> vector<16x128xf32>
    %c0_3 = arith.constant 0 : index
    %c0_4 = arith.constant 0 : index
    %3 = vector.load %arg3[%c0_3, %c0_4] : memref<1x128xf32, #tpu.memory_space<vmem>>, vector<1x128xf32>
    %4 = vector.broadcast %3 : vector<1x128xf32> to vector<16x128xf32>
    %5 = arith.addf %2, %4 : vector<16x128xf32>
    %cst_5 = arith.constant 0.000000e+00 : f32
    %6 = vector.broadcast %cst_5 : f32 to vector<16x128xf32>
    %7 = arith.maximumf %5, %6 : vector<16x128xf32>
    %8 = arith.truncf %7 : vector<16x128xf32> to vector<16x128xbf16>
    %c0_6 = arith.constant 0 : index
    %c0_7 = arith.constant 0 : index
    %9 = vector.load %arg4[%c0_6, %c0_7] : memref<128x128xbf16, #tpu.memory_space<vmem>>, vector<128x128xbf16>
    %cst_8 = arith.constant dense<0.000000e+00> : vector<16x128xf32>
    %10 = tpu.matmul %8, %9, %cst_8 {dimension_numbers = #tpu.dot_dimension_numbers<[1], [0], [0], [1], [0, 0, 1, 1], [], []>} : vector<16x128xbf16>, vector<128x128xbf16>, vector<16x128xf32> -> vector<16x128xf32>
    %c0_9 = arith.constant 0 : index
    %c0_10 = arith.constant 0 : index
    %11 = vector.load %arg5[%c0_9, %c0_10] : memref<1x128xf32, #tpu.memory_space<vmem>>, vector<1x128xf32>
    %12 = vector.broadcast %11 : vector<1x128xf32> to vector<16x128xf32>
    %13 = arith.addf %10, %12 : vector<16x128xf32>
    %cst_11 = arith.constant 0.000000e+00 : f32
    %14 = vector.broadcast %cst_11 : f32 to vector<16x128xf32>
    %15 = arith.maximumf %13, %14 : vector<16x128xf32>
    %16 = arith.truncf %15 : vector<16x128xf32> to vector<16x128xbf16>
    %c0_12 = arith.constant 0 : index
    %c0_13 = arith.constant 0 : index
    %17 = vector.load %arg6[%c0_12, %c0_13] : memref<128x128xbf16, #tpu.memory_space<vmem>>, vector<128x128xbf16>
    %cst_14 = arith.constant dense<0.000000e+00> : vector<16x128xf32>
    %18 = tpu.matmul %16, %17, %cst_14 {dimension_numbers = #tpu.dot_dimension_numbers<[1], [0], [0], [1], [0, 0, 1, 1], [], []>} : vector<16x128xbf16>, vector<128x128xbf16>, vector<16x128xf32> -> vector<16x128xf32>
    %c0_15 = arith.constant 0 : index
    %c0_16 = arith.constant 0 : index
    %19 = vector.load %arg7[%c0_15, %c0_16] : memref<1x128xf32, #tpu.memory_space<vmem>>, vector<1x128xf32>
    %20 = vector.broadcast %19 : vector<1x128xf32> to vector<16x128xf32>
    %21 = arith.addf %18, %20 : vector<16x128xf32>
    %cst_17 = arith.constant dense<0xFF800000> : vector<16xf32>
    %22 = vector.multi_reduction <maximumf>, %21, %cst_17 [1] : vector<16x128xf32> to vector<16xf32>
    %23 = vector.shape_cast %22 : vector<16xf32> to vector<16x1xf32>
    %24 = vector.broadcast %23 : vector<16x1xf32> to vector<16x128xf32>
    %25 = arith.subf %21, %24 : vector<16x128xf32>
    %cst_18 = arith.constant -8.000000e+01 : f32
    %26 = vector.broadcast %cst_18 : f32 to vector<16x128xf32>
    %27 = arith.maximumf %25, %26 : vector<16x128xf32>
    %28 = math.exp %27 : vector<16x128xf32>
    %29 = arith.truncf %28 : vector<16x128xf32> to vector<16x128xbf16>
    %c0_19 = arith.constant 0 : index
    %c0_20 = arith.constant 0 : index
    %30 = vector.load %arg8[%c0_19, %c0_20] : memref<128x128xbf16, #tpu.memory_space<vmem>>, vector<128x128xbf16>
    %cst_21 = arith.constant dense<0.000000e+00> : vector<16x128xf32>
    %31 = tpu.matmul %29, %30, %cst_21 {dimension_numbers = #tpu.dot_dimension_numbers<[1], [0], [0], [1], [0, 0, 1, 1], [], []>} : vector<16x128xbf16>, vector<128x128xbf16>, vector<16x128xf32> -> vector<16x128xf32>
    %cst_22 = arith.constant 9.99999991E-38 : f32
    %32 = vector.broadcast %cst_22 : f32 to vector<16x128xf32>
    %33 = arith.maximumf %31, %32 : vector<16x128xf32>
    %34 = tpu.reciprocal %33 {approx = true} : vector<16x128xf32> -> vector<16x128xf32>
    %35 = arith.mulf %33, %34 : vector<16x128xf32>
    %cst_23 = arith.constant 2.000000e+00 : f32
    %36 = vector.broadcast %cst_23 : f32 to vector<16x128xf32>
    %37 = arith.subf %36, %35 : vector<16x128xf32>
    %38 = arith.mulf %34, %37 : vector<16x128xf32>
    %39 = arith.truncf %38 : vector<16x128xf32> to vector<16x128xbf16>
    %c0_24 = arith.constant 0 : index
    %c0_25 = arith.constant 0 : index
    %40 = vector.load %arg9[%c0_24, %c0_25] : memref<128x128xbf16, #tpu.memory_space<vmem>>, vector<128x128xbf16>
    %cst_26 = arith.constant dense<0.000000e+00> : vector<16x128xf32>
    %41 = tpu.matmul %39, %40, %cst_26 {dimension_numbers = #tpu.dot_dimension_numbers<[1], [0], [0], [1], [0, 0, 1, 1], [], []>} : vector<16x128xbf16>, vector<128x128xbf16>, vector<16x128xf32> -> vector<16x128xf32>
    %42 = arith.mulf %28, %41 : vector<16x128xf32>
    %c0_27 = arith.constant 0 : index
    %c0_28 = arith.constant 0 : index
    %43 = vector.load %arg10[%c0_27, %c0_28] : memref<16x128xf32, #tpu.memory_space<vmem>>, vector<16x128xf32>
    tpu.vector_store %arg10[%c0_27, %c0_28], %42 {strides = array<i32>} : memref<16x128xf32, #tpu.memory_space<vmem>>, vector<16x128xf32>,
    return
  }
  func.func @transform_0(%arg0: i32) -> (i32, i32) {
    %c0_i32 = arith.constant 0 : i32
    %c0_i32_0 = arith.constant 0 : i32
    return %arg0, %c0_i32 : i32, i32
  }
  func.func @transform_1(%arg0: i32) -> (i32, i32) {
    %c0_i32 = arith.constant 0 : i32
    %c0_i32_0 = arith.constant 0 : i32
    %c0_i32_1 = arith.constant 0 : i32
    return %c0_i32, %c0_i32_0 : i32, i32
  }
  func.func @transform_2(%arg0: i32) -> (i32, i32) {
    %c0_i32 = arith.constant 0 : i32
    %c0_i32_0 = arith.constant 0 : i32
    %c0_i32_1 = arith.constant 0 : i32
    return %c0_i32, %c0_i32_0 : i32, i32
  }
  func.func @transform_3(%arg0: i32) -> (i32, i32) {
    %c0_i32 = arith.constant 0 : i32
    %c0_i32_0 = arith.constant 0 : i32
    %c0_i32_1 = arith.constant 0 : i32
    return %c0_i32, %c0_i32_0 : i32, i32
  }
  func.func @transform_4(%arg0: i32) -> (i32, i32) {
    %c0_i32 = arith.constant 0 : i32
    %c0_i32_0 = arith.constant 0 : i32
    %c0_i32_1 = arith.constant 0 : i32
    return %c0_i32, %c0_i32_0 : i32, i32
  }
  func.func @transform_5(%arg0: i32) -> (i32, i32) {
    %c0_i32 = arith.constant 0 : i32
    %c0_i32_0 = arith.constant 0 : i32
    %c0_i32_1 = arith.constant 0 : i32
    return %c0_i32, %c0_i32_0 : i32, i32
  }
  func.func @transform_6(%arg0: i32) -> (i32, i32) {
    %c0_i32 = arith.constant 0 : i32
    %c0_i32_0 = arith.constant 0 : i32
    %c0_i32_1 = arith.constant 0 : i32
    return %c0_i32, %c0_i32_0 : i32, i32
  }
  func.func @transform_7(%arg0: i32) -> (i32, i32) {
    %c0_i32 = arith.constant 0 : i32
    %c0_i32_0 = arith.constant 0 : i32
    %c0_i32_1 = arith.constant 0 : i32
    return %c0_i32, %c0_i32_0 : i32, i32
  }
  func.func @transform_8(%arg0: i32) -> (i32, i32) {
    %c0_i32 = arith.constant 0 : i32
    %c0_i32_0 = arith.constant 0 : i32
    %c0_i32_1 = arith.constant 0 : i32
    return %c0_i32, %c0_i32_0 : i32, i32
  }
  func.func @transform_9(%arg0: i32) -> (i32, i32) {
    %c0_i32 = arith.constant 0 : i32
    %c0_i32_0 = arith.constant 0 : i32
    return %arg0, %c0_i32 : i32, i32
  }
}

module attributes {stable_mosaic.version = 11 : i64} {
  func.func @qnet_kernel(%arg0: i32, %arg1: memref<16x128xbf16, #tpu.memory_space<vmem>>, %arg2: memref<128x128xbf16, #tpu.memory_space<vmem>>, %arg3: memref<1x128xf32, #tpu.memory_space<vmem>>, %arg4: memref<128x128xbf16, #tpu.memory_space<vmem>>, %arg5: memref<1x128xf32, #tpu.memory_space<vmem>>, %arg6: memref<128x128xbf16, #tpu.memory_space<vmem>>, %arg7: memref<1x128xf32, #tpu.memory_space<vmem>>, %arg8: memref<128x128xbf16, #tpu.memory_space<vmem>>, %arg9: memref<128x128xbf16, #tpu.memory_space<vmem>>, %arg10: memref<16x128xf32, #tpu.memory_space<vmem>>) attributes {dimension_semantics = [#tpu.dimension_semantics<parallel>], iteration_bounds = array<i64: 1>, scalar_prefetch = 0 : i64, scratch_operands = 0 : i64, tpu.core_type = #tpu.core_type<tc>, window_params = [{transform_indices = @transform_0, window_bounds = array<i64: 16, 128>}, {pipeline_mode = #tpu.pipeline_mode<synchronous>, transform_indices = @transform_1, window_bounds = array<i64: 128, 128>}, {pipeline_mode = #tpu.pipeline_mode<synchronous>, transform_indices = @transform_2, window_bounds = array<i64: 1, 128>}, {pipeline_mode = #tpu.pipeline_mode<synchronous>, transform_indices = @transform_3, window_bounds = array<i64: 128, 128>}, {pipeline_mode = #tpu.pipeline_mode<synchronous>, transform_indices = @transform_4, window_bounds = array<i64: 1, 128>}, {pipeline_mode = #tpu.pipeline_mode<synchronous>, transform_indices = @transform_5, window_bounds = array<i64: 128, 128>}, {pipeline_mode = #tpu.pipeline_mode<synchronous>, transform_indices = @transform_6, window_bounds = array<i64: 1, 128>}, {pipeline_mode = #tpu.pipeline_mode<synchronous>, transform_indices = @transform_7, window_bounds = array<i64: 128, 128>}, {pipeline_mode = #tpu.pipeline_mode<synchronous>, transform_indices = @transform_8, window_bounds = array<i64: 128, 128>}, {transform_indices = @transform_9, window_bounds = array<i64: 16, 128>}]} {
    %c0 = arith.constant 0 : index
    %c0_0 = arith.constant 0 : index
    %0 = vector.load %arg1[%c0, %c0_0] : memref<16x128xbf16, #tpu.memory_space<vmem>>, vector<16x128xbf16>
    %c0_1 = arith.constant 0 : index
    %c0_2 = arith.constant 0 : index
    %1 = vector.load %arg2[%c0_1, %c0_2] : memref<128x128xbf16, #tpu.memory_space<vmem>>, vector<128x128xbf16>
    %cst = arith.constant dense<0.000000e+00> : vector<16x128xf32>
    %2 = tpu.matmul %0, %1, %cst {dimension_numbers = #tpu.dot_dimension_numbers<[1], [0], [0], [1], [0, 0, 1, 1], [], []>} : vector<16x128xbf16>, vector<128x128xbf16>, vector<16x128xf32> -> vector<16x128xf32>
    %c0_3 = arith.constant 0 : index
    %c0_4 = arith.constant 0 : index
    %3 = vector.load %arg3[%c0_3, %c0_4] : memref<1x128xf32, #tpu.memory_space<vmem>>, vector<1x128xf32>
    %4 = vector.broadcast %3 : vector<1x128xf32> to vector<16x128xf32>
    %5 = arith.addf %2, %4 : vector<16x128xf32>
    %cst_5 = arith.constant 0.000000e+00 : f32
    %6 = vector.broadcast %cst_5 : f32 to vector<16x128xf32>
    %7 = arith.maximumf %5, %6 : vector<16x128xf32>
    %8 = arith.truncf %7 : vector<16x128xf32> to vector<16x128xbf16>
    %c0_6 = arith.constant 0 : index
    %c0_7 = arith.constant 0 : index
    %9 = vector.load %arg4[%c0_6, %c0_7] : memref<128x128xbf16, #tpu.memory_space<vmem>>, vector<128x128xbf16>
    %cst_8 = arith.constant dense<0.000000e+00> : vector<16x128xf32>
    %10 = tpu.matmul %8, %9, %cst_8 {dimension_numbers = #tpu.dot_dimension_numbers<[1], [0], [0], [1], [0, 0, 1, 1], [], []>} : vector<16x128xbf16>, vector<128x128xbf16>, vector<16x128xf32> -> vector<16x128xf32>
    %c0_9 = arith.constant 0 : index
    %c0_10 = arith.constant 0 : index
    %11 = vector.load %arg5[%c0_9, %c0_10] : memref<1x128xf32, #tpu.memory_space<vmem>>, vector<1x128xf32>
    %12 = vector.broadcast %11 : vector<1x128xf32> to vector<16x128xf32>
    %13 = arith.addf %10, %12 : vector<16x128xf32>
    %cst_11 = arith.constant 0.000000e+00 : f32
    %14 = vector.broadcast %cst_11 : f32 to vector<16x128xf32>
    %15 = arith.maximumf %13, %14 : vector<16x128xf32>
    %16 = arith.truncf %15 : vector<16x128xf32> to vector<16x128xbf16>
    %c0_12 = arith.constant 0 : index
    %c0_13 = arith.constant 0 : index
    %17 = vector.load %arg6[%c0_12, %c0_13] : memref<128x128xbf16, #tpu.memory_space<vmem>>, vector<128x128xbf16>
    %cst_14 = arith.constant dense<0.000000e+00> : vector<16x128xf32>
    %18 = tpu.matmul %16, %17, %cst_14 {dimension_numbers = #tpu.dot_dimension_numbers<[1], [0], [0], [1], [0, 0, 1, 1], [], []>} : vector<16x128xbf16>, vector<128x128xbf16>, vector<16x128xf32> -> vector<16x128xf32>
    %c0_15 = arith.constant 0 : index
    %c0_16 = arith.constant 0 : index
    %19 = vector.load %arg7[%c0_15, %c0_16] : memref<1x128xf32, #tpu.memory_space<vmem>>, vector<1x128xf32>
    %20 = vector.broadcast %19 : vector<1x128xf32> to vector<16x128xf32>
    %21 = arith.addf %18, %20 : vector<16x128xf32>
    %cst_17 = arith.constant dense<0xFF800000> : vector<16xf32>
    %22 = vector.multi_reduction <maximumf>, %21, %cst_17 [1] : vector<16x128xf32> to vector<16xf32>
    %23 = vector.shape_cast %22 : vector<16xf32> to vector<16x1xf32>
    %24 = vector.broadcast %23 : vector<16x1xf32> to vector<16x128xf32>
    %25 = arith.subf %21, %24 : vector<16x128xf32>
    %cst_18 = arith.constant -8.000000e+01 : f32
    %26 = vector.broadcast %cst_18 : f32 to vector<16x128xf32>
    %27 = arith.maximumf %25, %26 : vector<16x128xf32>
    %28 = math.exp %27 : vector<16x128xf32>
    %29 = arith.truncf %28 : vector<16x128xf32> to vector<16x128xbf16>
    %c0_19 = arith.constant 0 : index
    %c0_20 = arith.constant 0 : index
    %30 = vector.load %arg8[%c0_19, %c0_20] : memref<128x128xbf16, #tpu.memory_space<vmem>>, vector<128x128xbf16>
    %cst_21 = arith.constant dense<0.000000e+00> : vector<16x128xf32>
    %31 = tpu.matmul %29, %30, %cst_21 {dimension_numbers = #tpu.dot_dimension_numbers<[1], [0], [0], [1], [0, 0, 1, 1], [], []>} : vector<16x128xbf16>, vector<128x128xbf16>, vector<16x128xf32> -> vector<16x128xf32>
    %cst_22 = arith.constant 9.99999991E-38 : f32
    %32 = vector.broadcast %cst_22 : f32 to vector<16x128xf32>
    %33 = arith.maximumf %31, %32 : vector<16x128xf32>
    %34 = tpu.reciprocal %33 {approx = true} : vector<16x128xf32> -> vector<16x128xf32>
    %35 = arith.mulf %33, %34 : vector<16x128xf32>
    %cst_23 = arith.constant 2.000000e+00 : f32
    %36 = vector.broadcast %cst_23 : f32 to vector<16x128xf32>
    %37 = arith.subf %36, %35 : vector<16x128xf32>
    %38 = arith.mulf %34, %37 : vector<16x128xf32>
    %39 = arith.truncf %38 : vector<16x128xf32> to vector<16x128xbf16>
    %c0_24 = arith.constant 0 : index
    %c0_25 = arith.constant 0 : index
    %40 = vector.load %arg9[%c0_24, %c0_25] : memref<128x128xbf16, #tpu.memory_space<vmem>>, vector<128x128xbf16>
    %cst_26 = arith.constant dense<0.000000e+00> : vector<16x128xf32>
    %41 = tpu.matmul %39, %40, %cst_26 {dimension_numbers = #tpu.dot_dimension_numbers<[1], [0], [0], [1], [0, 0, 1, 1], [], []>} : vector<16x128xbf16>, vector<128x128xbf16>, vector<16x128xf32> -> vector<16x128xf32>
    %42 = arith.mulf %28, %41 : vector<16x128xf32>
    %c0_27 = arith.constant 0 : index
    %c0_28 = arith.constant 0 : index
    %43 = vector.load %arg10[%c0_27, %c0_28] : memref<16x128xf32, #tpu.memory_space<vmem>>, vector<16x128xf32>
    tpu.vector_store %arg10[%c0_27, %c0_28], %42 {strides = array<i32>} : memref<16x128xf32, #tpu.memory_space<vmem>>, vector<16x128xf32>,
    return
  }
  func.func @transform_0(%arg0: i32) -> (i32, i32) {
    %c0_i32 = arith.constant 0 : i32
    %c0_i32_0 = arith.constant 0 : i32
    return %arg0, %c0_i32 : i32, i32
  }
  func.func @transform_1(%arg0: i32) -> (i32, i32) {
    %c0_i32 = arith.constant 0 : i32
    %c0_i32_0 = arith.constant 0 : i32
    %c0_i32_1 = arith.constant 0 : i32
    return %c0_i32, %c0_i32_0 : i32, i32
  }
  func.func @transform_2(%arg0: i32) -> (i32, i32) {
    %c0_i32 = arith.constant 0 : i32
    %c0_i32_0 = arith.constant 0 : i32
    %c0_i32_1 = arith.constant 0 : i32
    return %c0_i32, %c0_i32_0 : i32, i32
  }
  func.func @transform_3(%arg0: i32) -> (i32, i32) {
    %c0_i32 = arith.constant 0 : i32
    %c0_i32_0 = arith.constant 0 : i32
    %c0_i32_1 = arith.constant 0 : i32
    return %c0_i32, %c0_i32_0 : i32, i32
  }
  func.func @transform_4(%arg0: i32) -> (i32, i32) {
    %c0_i32 = arith.constant 0 : i32
    %c0_i32_0 = arith.constant 0 : i32
    %c0_i32_1 = arith.constant 0 : i32
    return %c0_i32, %c0_i32_0 : i32, i32
  }
  func.func @transform_5(%arg0: i32) -> (i32, i32) {
    %c0_i32 = arith.constant 0 : i32
    %c0_i32_0 = arith.constant 0 : i32
    %c0_i32_1 = arith.constant 0 : i32
    return %c0_i32, %c0_i32_0 : i32, i32
  }
  func.func @transform_6(%arg0: i32) -> (i32, i32) {
    %c0_i32 = arith.constant 0 : i32
    %c0_i32_0 = arith.constant 0 : i32
    %c0_i32_1 = arith.constant 0 : i32
    return %c0_i32, %c0_i32_0 : i32, i32
  }
  func.func @transform_7(%arg0: i32) -> (i32, i32) {
    %c0_i32 = arith.constant 0 : i32
    %c0_i32_0 = arith.constant 0 : i32
    %c0_i32_1 = arith.constant 0 : i32
    return %c0_i32, %c0_i32_0 : i32, i32
  }
  func.func @transform_8(%arg0: i32) -> (i32, i32) {
    %c0_i32 = arith.constant 0 : i32
    %c0_i32_0 = arith.constant 0 : i32
    %c0_i32_1 = arith.constant 0 : i32
    return %c0_i32, %c0_i32_0 : i32, i32
  }
  func.func @transform_9(%arg0: i32) -> (i32, i32) {
    %c0_i32 = arith.constant 0 : i32
    %c0_i32_0 = arith.constant 0 : i32
    return %arg0, %c0_i32 : i32, i32
  }
}

</mosaic_0001>

<llo_original>
// kernel: tpu_custom_call.1
$region0: #{tpu_custom_call.1}
  #allocation0 [shape = 'u32[]', space=smem, size = 0x4, offset = 0x4, fixed_abs, tag = 'smem constant byte address 0x4 - core index']
  #allocation1 [shape = 'u32[144,128]{1,0:T(1,128)}', space=vmem, size = 0x12000, scoped, tag = 'internal scratch']
  %s0 = inlined_call_operand.hbm [shape: bf16[16,128], index: 0, kind: input, shape index: {}]
  %s1 = inlined_call_operand.hbm [shape: bf16[128,128], index: 1, kind: input, shape index: {}]
  %s2 = inlined_call_operand.vmem [shape: f32[1,128], index: 2, kind: input, shape index: {}]
  %s3 = inlined_call_operand.hbm [shape: bf16[128,128], index: 3, kind: input, shape index: {}]
  %s4 = inlined_call_operand.vmem [shape: f32[1,128], index: 4, kind: input, shape index: {}]
  %s5 = inlined_call_operand.hbm [shape: bf16[128,128], index: 5, kind: input, shape index: {}]
  %s6 = inlined_call_operand.vmem [shape: f32[1,128], index: 6, kind: input, shape index: {}]
  %s7 = inlined_call_operand.hbm [shape: bf16[128,128], index: 7, kind: input, shape index: {}]
  %s8 = inlined_call_operand.hbm [shape: bf16[128,128], index: 8, kind: input, shape index: {}]
  %s9 = inlined_call_operand.hbm [shape: f32[16,128], index: 9, kind: output, shape index: {}]
  %s10 = sld [smem:[#allocation0]]
  $region70: #{tpu_custom_call.1} parent=0
    _
  %s12 = ssub.s32 1, %s10
  %s13 = scalar_select 0, %s12, %s10
  $region1: #{tpu_custom_call.1} parent=0
    #allocation2 [shape = 'u8[4096]{0}', space=vmem, size = 0x1000, scoped, tag = 'input window, operand 0, single buffered']
    #allocation3 [shape = 's32[1]{0}', space=sflag, size = 0x4, scoped, tag = 'scoped memory for tpu_custom_call.1']
    #allocation4 [shape = 's32[1]{0}', space=sflag, size = 0x4, scoped, tag = 'scoped memory for tpu_custom_call.1']
    #allocation5 [shape = 'u8[32768]{0}', space=vmem, size = 0x8000, scoped, tag = 'input window, operand 1, single buffered']
    #allocation6 [shape = 's32[1]{0}', space=sflag, size = 0x4, scoped, tag = 'scoped memory for tpu_custom_call.1']
    #allocation7 [shape = 'u8[32768]{0}', space=vmem, size = 0x8000, scoped, tag = 'input window, operand 3, single buffered']
    #allocation8 [shape = 'u8[32768]{0}', space=vmem, size = 0x8000, scoped, tag = 'input window, operand 5, single buffered']
    #allocation9 [shape = 's32[1]{0}', space=sflag, size = 0x4, scoped, tag = 'scoped memory for tpu_custom_call.1']
    #allocation10 [shape = 'u8[32768]{0}', space=vmem, size = 0x8000, scoped, tag = 'input window, operand 7, single buffered']
    #allocation11 [shape = 'u8[32768]{0}', space=vmem, size = 0x8000, scoped, tag = 'input window, operand 8, single buffered']
    #allocation12 [shape = 's32[1]{0}', space=sflag, size = 0x4, scoped, tag = 'scoped memory for tpu_custom_call.1']
    #allocation13 [shape = 'u8[8192]{0}', space=vmem, size = 0x2000, scoped, tag = 'output window, operand 0, single buffered']
    %14 = vsyncpa [#allocation3], 0
    %15 = vsyncpa [#allocation6], 0
    %16 = vsyncpa [#allocation9], 0
    %17 = vsyncpa [#allocation12], 0
    %18 = vsyncpa [#allocation4], 0
    // Predicated region
    $region2: #{tpu_custom_call.1} parent=1 // pred_check
      _
    $region3: #{tpu_custom_call.1} parent=1 // pred_check_branch
      %20 = sbr.rel (0) target = $region5
    $region4: #{tpu_custom_call.1} parent=1 // pred_region
      %s22 = ssub.s32 128, 128
      %23 = vsyncadd [#allocation3], %s22
      %s24 = sshll.u32 [#allocation2], 4
      %s25 = int_to_ptr.vmem [resolvable:$true] %s24
      %30 = dma.hbm_to_vmem [thread:$0]  %s0, 128, %s25, [#allocation3], 64, 64, 4
    $region5: #{tpu_custom_call.1} parent=1 // pred_fallthru
      _
    // Predicated region
    $region6: #{tpu_custom_call.1} parent=1 // pred_check
      _
    $region7: #{tpu_custom_call.1} parent=1 // pred_check_branch
      %32 = sbr.rel (0) target = $region9
    $region8: #{tpu_custom_call.1} parent=1 // pred_region
      %s34 = ssub.s32 1024, 1024
      %35 = vsyncadd [#allocation6], %s34
      %s36 = sshll.u32 [#allocation5], 4
      %s37 = int_to_ptr.vmem [resolvable:$true] %s36
      %42 = dma.hbm_to_vmem [thread:$0]  %s1, 1024, %s37, [#allocation6], 64, 64, 4
    $region9: #{tpu_custom_call.1} parent=1 // pred_fallthru
      _
    // Predicated region
    $region10: #{tpu_custom_call.1} parent=1 // pred_check
      _
    $region11: #{tpu_custom_call.1} parent=1 // pred_check_branch
      %44 = sbr.rel (0) target = $region13
    $region12: #{tpu_custom_call.1} parent=1 // pred_region
      _
    $region13: #{tpu_custom_call.1} parent=1 // pred_fallthru
      _
    // Predicated region
    $region14: #{tpu_custom_call.1} parent=1 // pred_check
      _
    $region15: #{tpu_custom_call.1} parent=1 // pred_check_branch
      %46 = sbr.rel (0) target = $region17
    $region16: #{tpu_custom_call.1} parent=1 // pred_region
      %s48 = ssub.s32 1024, 1024
      %49 = vsyncadd [#allocation6], %s48
      %s50 = sshll.u32 [#allocation7], 4
      %s51 = int_to_ptr.vmem [resolvable:$true] %s50
      %56 = dma.hbm_to_vmem [thread:$0]  %s3, 1024, %s51, [#allocation6], 64, 64, 4
    $region17: #{tpu_custom_call.1} parent=1 // pred_fallthru
      _
    // Predicated region
    $region18: #{tpu_custom_call.1} parent=1 // pred_check
      _
    $region19: #{tpu_custom_call.1} parent=1 // pred_check_branch
      %58 = sbr.rel (0) target = $region21
    $region20: #{tpu_custom_call.1} parent=1 // pred_region
      _
    $region21: #{tpu_custom_call.1} parent=1 // pred_fallthru
      _
    // Predicated region
    $region22: #{tpu_custom_call.1} parent=1 // pred_check
      _
    $region23: #{tpu_custom_call.1} parent=1 // pred_check_branch
      %60 = sbr.rel (0) target = $region25
    $region24: #{tpu_custom_call.1} parent=1 // pred_region
      %s62 = ssub.s32 1024, 1024
      %63 = vsyncadd [#allocation9], %s62
      %s64 = sshll.u32 [#allocation8], 4
      %s65 = int_to_ptr.vmem [resolvable:$true] %s64
      %70 = dma.hbm_to_vmem [thread:$0]  %s5, 1024, %s65, [#allocation9], 64, 64, 4
    $region25: #{tpu_custom_call.1} parent=1 // pred_fallthru
      _
    // Predicated region
    $region26: #{tpu_custom_call.1} parent=1 // pred_check
      _
    $region27: #{tpu_custom_call.1} parent=1 // pred_check_branch
      %72 = sbr.rel (0) target = $region29
    $region28: #{tpu_custom_call.1} parent=1 // pred_region
      _
    $region29: #{tpu_custom_call.1} parent=1 // pred_fallthru
      _
    // Predicated region
    $region30: #{tpu_custom_call.1} parent=1 // pred_check
      _
    $region31: #{tpu_custom_call.1} parent=1 // pred_check_branch
      %74 = sbr.rel (0) target = $region33
    $region32: #{tpu_custom_call.1} parent=1 // pred_region
      %s76 = ssub.s32 1024, 1024
      %77 = vsyncadd [#allocation9], %s76
      %s78 = sshll.u32 [#allocation10], 4
      %s79 = int_to_ptr.vmem [resolvable:$true] %s78
      %84 = dma.hbm_to_vmem [thread:$0]  %s7, 1024, %s79, [#allocation9], 64, 64, 4
    $region33: #{tpu_custom_call.1} parent=1 // pred_fallthru
      _
    // Predicated region
    $region34: #{tpu_custom_call.1} parent=1 // pred_check
      _
    $region35: #{tpu_custom_call.1} parent=1 // pred_check_branch
      %86 = sbr.rel (0) target = $region37
    $region36: #{tpu_custom_call.1} parent=1 // pred_region
      %s88 = ssub.s32 1024, 1024
      %89 = vsyncadd [#allocation12], %s88
      %s90 = sshll.u32 [#allocation11], 4
      %s91 = int_to_ptr.vmem [resolvable:$true] %s90
      %96 = dma.hbm_to_vmem [thread:$0]  %s8, 1024, %s91, [#allocation12], 64, 64, 4
    $region37: #{tpu_custom_call.1} parent=1 // pred_fallthru
      _
    // Predicated region
    $region38: #{tpu_custom_call.1} parent=1 // pred_check
      _
    $region39: #{tpu_custom_call.1} parent=1 // pred_check_branch
      %98 = sbr.rel (0) target = $region41
    $region40: #{tpu_custom_call.1} parent=1 // pred_region
      %99 = dma.done [#allocation3], 128
    $region41: #{tpu_custom_call.1} parent=1 // pred_fallthru
      _
    // Predicated region
    $region42: #{tpu_custom_call.1} parent=1 // pred_check
      _
    $region43: #{tpu_custom_call.1} parent=1 // pred_check_branch
      %101 = sbr.rel (0) target = $region45
    $region44: #{tpu_custom_call.1} parent=1 // pred_region
      %102 = dma.done [#allocation6], 1024
    $region45: #{tpu_custom_call.1} parent=1 // pred_fallthru
      _
    // Predicated region
    $region46: #{tpu_custom_call.1} parent=1 // pred_check
      _
    $region47: #{tpu_custom_call.1} parent=1 // pred_check_branch
      %104 = sbr.rel (0) target = $region49
    $region48: #{tpu_custom_call.1} parent=1 // pred_region
      %105 = dma.done [#allocation6], 1024
    $region49: #{tpu_custom_call.1} parent=1 // pred_fallthru
      _
    // Predicated region
    $region50: #{tpu_custom_call.1} parent=1 // pred_check
      _
    $region51: #{tpu_custom_call.1} parent=1 // pred_check_branch
      %107 = sbr.rel (0) target = $region53
    $region52: #{tpu_custom_call.1} parent=1 // pred_region
      %108 = dma.done [#allocation9], 1024
    $region53: #{tpu_custom_call.1} parent=1 // pred_fallthru
      _
    // Predicated region
    $region54: #{tpu_custom_call.1} parent=1 // pred_check
      _
    $region55: #{tpu_custom_call.1} parent=1 // pred_check_branch
      %110 = sbr.rel (0) target = $region57
    $region56: #{tpu_custom_call.1} parent=1 // pred_region
      %111 = dma.done [#allocation9], 1024
    $region57: #{tpu_custom_call.1} parent=1 // pred_fallthru
      _
    // Predicated region
    $region58: #{tpu_custom_call.1} parent=1 // pred_check
      _
    $region59: #{tpu_custom_call.1} parent=1 // pred_check_branch
      %113 = sbr.rel (0) target = $region61
    $region60: #{tpu_custom_call.1} parent=1 // pred_region
      %114 = dma.done [#allocation12], 1024
    $region61: #{tpu_custom_call.1} parent=1 // pred_fallthru
      _
    %v116 = vld [vmem:[#allocation2] sm:$0xf]
    %v117 = vld [vmem:[#allocation2 + $0x4] sm:$0xf]
    %v118 = vld [vmem:[#allocation5] sm:$0xf]
    %v119 = vld [vmem:[#allocation5 + $0x4] sm:$0xf]
    %v120 = vld [vmem:[#allocation5 + $0x8] sm:$0xf]
    %v121 = vld [vmem:[#allocation5 + $0xc] sm:$0xf]
    %v122 = vld [vmem:[#allocation5 + $0x10] sm:$0xf]
    %v123 = vld [vmem:[#allocation5 + $0x14] sm:$0xf]
    %v124 = vld [vmem:[#allocation5 + $0x18] sm:$0xf]
    %v125 = vld [vmem:[#allocation5 + $0x1c] sm:$0xf]
    %v126 = vld [vmem:[#allocation5 + $0x20] sm:$0xf]
    %v127 = vld [vmem:[#allocation5 + $0x24] sm:$0xf]
    %v128 = vld [vmem:[#allocation5 + $0x28] sm:$0xf]
    %v129 = vld [vmem:[#allocation5 + $0x2c] sm:$0xf]
    %v130 = vld [vmem:[#allocation5 + $0x30] sm:$0xf]
    %v131 = vld [vmem:[#allocation5 + $0x34] sm:$0xf]
    %v132 = vld [vmem:[#allocation5 + $0x38] sm:$0xf]
    %v133 = vld [vmem:[#allocation5 + $0x3c] sm:$0xf]
    %v134 = vld [vmem:[%s2] sm:$0x1]
    %v136 = vlaneseq
    %v137 = vshrl.u32 %v136, 7
    %v138 = vsub.s32 0, %v137
    %v139 = vrot.slane %v134, %v138
    %v143 = vunpack.c.l.b16 %v116
    %v144 = vunpack.c.l.b16 %v117
    %v145 = vpack.c.b16 %v144, %v143
    %v163 = vunpack.c.l.b16 %v118
    %v164 = vunpack.c.l.b16 %v119
    %v165 = vunpack.c.l.b16 %v120
    %v166 = vunpack.c.l.b16 %v121
    %v167 = vunpack.c.l.b16 %v122
    %v168 = vunpack.c.l.b16 %v123
    %v169 = vunpack.c.l.b16 %v124
    %v170 = vunpack.c.l.b16 %v125
    %v171 = vunpack.c.l.b16 %v126
    %v172 = vunpack.c.l.b16 %v127
    %v173 = vunpack.c.l.b16 %v128
    %v174 = vunpack.c.l.b16 %v129
    %v175 = vunpack.c.l.b16 %v130
    %v176 = vunpack.c.l.b16 %v131
    %v177 = vunpack.c.l.b16 %v132
    %v178 = vunpack.c.l.b16 %v133
    %v179 = vpack.c.b16 %v164, %v163
    %v180 = vpack.c.b16 %v166, %v165
    %v181 = vpack.c.b16 %v168, %v167
    %v182 = vpack.c.b16 %v170, %v169
    %v183 = vpack.c.b16 %v172, %v171
    %v184 = vpack.c.b16 %v174, %v173
    %v185 = vpack.c.b16 %v176, %v175
    %v186 = vpack.c.b16 %v178, %v177
    %195 = vmatprep.subr.bf16.mxu0 0
    %196 = vmatpush1.bf16.msra.mxu0 %v186
    %197 = vmatprep.subr.bf16.mxu0 0
    %198 = vmatpush1.bf16.msra.mxu0 %v185
    %199 = vmatprep.subr.bf16.mxu0 0
    %200 = vmatpush1.bf16.msra.mxu0 %v184
    %201 = vmatprep.subr.bf16.mxu0 0
    %202 = vmatpush1.bf16.msra.mxu0 %v183
    %203 = vmatprep.subr.bf16.mxu0 0
    %204 = vmatpush1.bf16.msra.mxu0 %v182
    %205 = vmatprep.subr.bf16.mxu0 0
    %206 = vmatpush1.bf16.msra.mxu0 %v181
    %207 = vmatprep.subr.bf16.mxu0 0
    %208 = vmatpush1.bf16.msra.mxu0 %v180
    %209 = vmatprep.subr.bf16.mxu0 0
    %210 = vmatpush1.bf16.msra.mxu0 %v179
    %211 = vmatprep.subr.bf16.mxu0 0
    %212 = vmatpush2.bf16.msra.mxu0 0
    %213 = vmatprep.subr.bf16.mxu0 0
    %214 = vmatpush2.bf16.msra.mxu0 0
    %215 = vmatprep.subr.bf16.mxu0 0
    %216 = vmatpush2.bf16.msra.mxu0 0
    %217 = vmatprep.subr.bf16.mxu0 0
    %218 = vmatpush2.bf16.msra.mxu0 0
    %219 = vmatprep.subr.bf16.mxu0 0
    %220 = vmatpush2.bf16.msra.mxu0 0
    %221 = vmatprep.subr.bf16.mxu0 0
    %222 = vmatpush2.bf16.msra.mxu0 0
    %223 = vmatprep.subr.bf16.mxu0 0
    %224 = vmatpush2.bf16.msra.mxu0 0
    %225 = vmatprep.subr.bf16.mxu0 0
    %226 = vmatpush2.bf16.msra.mxu0 0
    %227 = vmatprep.mubr.bf16.mxu0 0
    %228 = vmatmul.mubr.bf16.gmra.mxu0 %v145
    %v229 = vpop.f32.mrf.mxu0
    %v230 = vadd.f32 %v139, %v229
    %v231 = vpop.f32.mrf.mxu0
    %v232 = vpop.f32.mrf.mxu0
    %v233 = vadd.f32 %v139, %v232
    %v234 = vpop.f32.mrf.mxu0
    %235 = vdwg.mxu0
    %v236 = vmax.f32 %v230, 0.0
    %v237 = vmax.f32 %v233, 0.0
    %v238 = vpack.c.bf16 %v237, %v236
    %v239 = vld [vmem:[#allocation7] sm:$0xf]
    %v240 = vld [vmem:[#allocation7 + $0x4] sm:$0xf]
    %v241 = vld [vmem:[#allocation7 + $0x8] sm:$0xf]
    %v242 = vld [vmem:[#allocation7 + $0xc] sm:$0xf]
    %v243 = vld [vmem:[#allocation7 + $0x10] sm:$0xf]
    %v244 = vld [vmem:[#allocation7 + $0x14] sm:$0xf]
    %v245 = vld [vmem:[#allocation7 + $0x18] sm:$0xf]
    %v246 = vld [vmem:[#allocation7 + $0x1c] sm:$0xf]
    %v247 = vld [vmem:[#allocation7 + $0x20] sm:$0xf]
    %v248 = vld [vmem:[#allocation7 + $0x24] sm:$0xf]
    %v249 = vld [vmem:[#allocation7 + $0x28] sm:$0xf]
    %v250 = vld [vmem:[#allocation7 + $0x2c] sm:$0xf]
    %v251 = vld [vmem:[#allocation7 + $0x30] sm:$0xf]
    %v252 = vld [vmem:[#allocation7 + $0x34] sm:$0xf]
    %v253 = vld [vmem:[#allocation7 + $0x38] sm:$0xf]
    %v254 = vld [vmem:[#allocation7 + $0x3c] sm:$0xf]
    %v255 = vld [vmem:[%s4] sm:$0x1]
    %v257 = vlaneseq
    %v258 = vshrl.u32 %v257, 7
    %v259 = vsub.s32 0, %v258
    %v260 = vrot.slane %v255, %v259
    %v278 = vunpack.c.l.b16 %v239
    %v279 = vunpack.c.l.b16 %v240
    %v280 = vunpack.c.l.b16 %v241
    %v281 = vunpack.c.l.b16 %v242
    %v282 = vunpack.c.l.b16 %v243
    %v283 = vunpack.c.l.b16 %v244
    %v284 = vunpack.c.l.b16 %v245
    %v285 = vunpack.c.l.b16 %v246
    %v286 = vunpack.c.l.b16 %v247
    %v287 = vunpack.c.l.b16 %v248
    %v288 = vunpack.c.l.b16 %v249
    %v289 = vunpack.c.l.b16 %v250
    %v290 = vunpack.c.l.b16 %v251
    %v291 = vunpack.c.l.b16 %v252
    %v292 = vunpack.c.l.b16 %v253
    %v293 = vunpack.c.l.b16 %v254
    %v294 = vpack.c.b16 %v279, %v278
    %v295 = vpack.c.b16 %v281, %v280
    %v296 = vpack.c.b16 %v283, %v282
    %v297 = vpack.c.b16 %v285, %v284
    %v298 = vpack.c.b16 %v287, %v286
    %v299 = vpack.c.b16 %v289, %v288
    %v300 = vpack.c.b16 %v291, %v290
    %v301 = vpack.c.b16 %v293, %v292
    %310 = vmatprep.subr.bf16.mxu0 0
    %311 = vmatpush1.bf16.msra.mxu0 %v301
    %312 = vmatprep.subr.bf16.mxu0 0
    %313 = vmatpush1.bf16.msra.mxu0 %v300
    %314 = vmatprep.subr.bf16.mxu0 0
    %315 = vmatpush1.bf16.msra.mxu0 %v299
    %316 = vmatprep.subr.bf16.mxu0 0
    %317 = vmatpush1.bf16.msra.mxu0 %v298
    %318 = vmatprep.subr.bf16.mxu0 0
    %319 = vmatpush1.bf16.msra.mxu0 %v297
    %320 = vmatprep.subr.bf16.mxu0 0
    %321 = vmatpush1.bf16.msra.mxu0 %v296
    %322 = vmatprep.subr.bf16.mxu0 0
    %323 = vmatpush1.bf16.msra.mxu0 %v295
    %324 = vmatprep.subr.bf16.mxu0 0
    %325 = vmatpush1.bf16.msra.mxu0 %v294
    %326 = vmatprep.subr.bf16.mxu0 0
    %327 = vmatpush2.bf16.msra.mxu0 0
    %328 = vmatprep.subr.bf16.mxu0 0
    %329 = vmatpush2.bf16.msra.mxu0 0
    %330 = vmatprep.subr.bf16.mxu0 0
    %331 = vmatpush2.bf16.msra.mxu0 0
    %332 = vmatprep.subr.bf16.mxu0 0
    %333 = vmatpush2.bf16.msra.mxu0 0
    %334 = vmatprep.subr.bf16.mxu0 0
    %335 = vmatpush2.bf16.msra.mxu0 0
    %336 = vmatprep.subr.bf16.mxu0 0
    %337 = vmatpush2.bf16.msra.mxu0 0
    %338 = vmatprep.subr.bf16.mxu0 0
    %339 = vmatpush2.bf16.msra.mxu0 0
    %340 = vmatprep.subr.bf16.mxu0 0
    %341 = vmatpush2.bf16.msra.mxu0 0
    %342 = vmatprep.mubr.bf16.mxu0 0
    %343 = vmatmul.mubr.bf16.gmra.mxu0 %v238
    %v344 = vpop.f32.mrf.mxu0
    %v345 = vadd.f32 %v260, %v344
    %v346 = vpop.f32.mrf.mxu0
    %v347 = vpop.f32.mrf.mxu0
    %v348 = vadd.f32 %v260, %v347
    %v349 = vpop.f32.mrf.mxu0
    %350 = vdwg.mxu0
    %v351 = vmax.f32 %v345, 0.0
    %v352 = vmax.f32 %v348, 0.0
    %v353 = vpack.c.bf16 %v352, %v351
    %v354 = vld [vmem:[#allocation8] sm:$0xf]
    %v355 = vld [vmem:[#allocation8 + $0x4] sm:$0xf]
    %v356 = vld [vmem:[#allocation8 + $0x8] sm:$0xf]
    %v357 = vld [vmem:[#allocation8 + $0xc] sm:$0xf]
    %v358 = vld [vmem:[#allocation8 + $0x10] sm:$0xf]
    %v359 = vld [vmem:[#allocation8 + $0x14] sm:$0xf]
    %v360 = vld [vmem:[#allocation8 + $0x18] sm:$0xf]
    %v361 = vld [vmem:[#allocation8 + $0x1c] sm:$0xf]
    %v362 = vld [vmem:[#allocation8 + $0x20] sm:$0xf]
    %v363 = vld [vmem:[#allocation8 + $0x24] sm:$0xf]
    %v364 = vld [vmem:[#allocation8 + $0x28] sm:$0xf]
    %v365 = vld [vmem:[#allocation8 + $0x2c] sm:$0xf]
    %v366 = vld [vmem:[#allocation8 + $0x30] sm:$0xf]
    %v367 = vld [vmem:[#allocation8 + $0x34] sm:$0xf]
    %v368 = vld [vmem:[#allocation8 + $0x38] sm:$0xf]
    %v369 = vld [vmem:[#allocation8 + $0x3c] sm:$0xf]
    %v370 = vld [vmem:[%s6] sm:$0x1]
    %v372 = vlaneseq
    %v373 = vshrl.u32 %v372, 7
    %v374 = vsub.s32 0, %v373
    %v375 = vrot.slane %v370, %v374
    %v393 = vunpack.c.l.b16 %v354
    %v394 = vunpack.c.l.b16 %v355
    %v395 = vunpack.c.l.b16 %v356
    %v396 = vunpack.c.l.b16 %v357
    %v397 = vunpack.c.l.b16 %v358
    %v398 = vunpack.c.l.b16 %v359
    %v399 = vunpack.c.l.b16 %v360
    %v400 = vunpack.c.l.b16 %v361
    %v401 = vunpack.c.l.b16 %v362
    %v402 = vunpack.c.l.b16 %v363
    %v403 = vunpack.c.l.b16 %v364
    %v404 = vunpack.c.l.b16 %v365
    %v405 = vunpack.c.l.b16 %v366
    %v406 = vunpack.c.l.b16 %v367
    %v407 = vunpack.c.l.b16 %v368
    %v408 = vunpack.c.l.b16 %v369
    %v409 = vpack.c.b16 %v394, %v393
    %v410 = vpack.c.b16 %v396, %v395
    %v411 = vpack.c.b16 %v398, %v397
    %v412 = vpack.c.b16 %v400, %v399
    %v413 = vpack.c.b16 %v402, %v401
    %v414 = vpack.c.b16 %v404, %v403
    %v415 = vpack.c.b16 %v406, %v405
    %v416 = vpack.c.b16 %v408, %v407
    %425 = vmatprep.subr.bf16.mxu0 0
    %426 = vmatpush1.bf16.msra.mxu0 %v416
    %427 = vmatprep.subr.bf16.mxu0 0
    %428 = vmatpush1.bf16.msra.mxu0 %v415
    %429 = vmatprep.subr.bf16.mxu0 0
    %430 = vmatpush1.bf16.msra.mxu0 %v414
    %431 = vmatprep.subr.bf16.mxu0 0
    %432 = vmatpush1.bf16.msra.mxu0 %v413
    %433 = vmatprep.subr.bf16.mxu0 0
    %434 = vmatpush1.bf16.msra.mxu0 %v412
    %435 = vmatprep.subr.bf16.mxu0 0
    %436 = vmatpush1.bf16.msra.mxu0 %v411
    %437 = vmatprep.subr.bf16.mxu0 0
    %438 = vmatpush1.bf16.msra.mxu0 %v410
    %439 = vmatprep.subr.bf16.mxu0 0
    %440 = vmatpush1.bf16.msra.mxu0 %v409
    %441 = vmatprep.subr.bf16.mxu0 0
    %442 = vmatpush2.bf16.msra.mxu0 0
    %443 = vmatprep.subr.bf16.mxu0 0
    %444 = vmatpush2.bf16.msra.mxu0 0
    %445 = vmatprep.subr.bf16.mxu0 0
    %446 = vmatpush2.bf16.msra.mxu0 0
    %447 = vmatprep.subr.bf16.mxu0 0
    %448 = vmatpush2.bf16.msra.mxu0 0
    %449 = vmatprep.subr.bf16.mxu0 0
    %450 = vmatpush2.bf16.msra.mxu0 0
    %451 = vmatprep.subr.bf16.mxu0 0
    %452 = vmatpush2.bf16.msra.mxu0 0
    %453 = vmatprep.subr.bf16.mxu0 0
    %454 = vmatpush2.bf16.msra.mxu0 0
    %455 = vmatprep.subr.bf16.mxu0 0
    %456 = vmatpush2.bf16.msra.mxu0 0
    %457 = vmatprep.mubr.bf16.mxu0 0
    %458 = vmatmul.mubr.bf16.gmra.mxu0 %v353
    %v459 = vpop.f32.mrf.mxu0
    %v460 = vadd.f32 %v375, %v459
    %v461 = vpop.f32.mrf.mxu0
    %v462 = vpop.f32.mrf.mxu0
    %v463 = vadd.f32 %v375, %v462
    %v464 = vpop.f32.mrf.mxu0
    %465 = vdwg.mxu0
    %466 = vmax.xlane.f32.xlu0 %v460
    %v467 = vpop.xlane.xlu0 %466
    %468 = vmax.xlane.f32.xlu0 %v463
    %v469 = vpop.xlane.xlu0 %468
    %v470 = vsub.f32 %v460, %v467
    %v471 = vsub.f32 %v463, %v469
    %v472 = vmax.f32 %v470, -80.0
    %v473 = vmax.f32 %v471, -80.0
    %v474 = vmul.f32 %v472, 1.442695
    %v475 = vpow.pop %v474
    %v476 = vmul.f32 %v473, 1.442695
    %v477 = vpow.pop %v476
    %v478 = vpack.c.bf16 %v477, %v475
    %v479 = vld [vmem:[#allocation10] sm:$0xf]
    %v480 = vld [vmem:[#allocation10 + $0x4] sm:$0xf]
    %v481 = vld [vmem:[#allocation10 + $0x8] sm:$0xf]
    %v482 = vld [vmem:[#allocation10 + $0xc] sm:$0xf]
    %v483 = vld [vmem:[#allocation10 + $0x10] sm:$0xf]
    %v484 = vld [vmem:[#allocation10 + $0x14] sm:$0xf]
    %v485 = vld [vmem:[#allocation10 + $0x18] sm:$0xf]
    %v486 = vld [vmem:[#allocation10 + $0x1c] sm:$0xf]
    %v487 = vld [vmem:[#allocation10 + $0x20] sm:$0xf]
    %v488 = vld [vmem:[#allocation10 + $0x24] sm:$0xf]
    %v489 = vld [vmem:[#allocation10 + $0x28] sm:$0xf]
    %v490 = vld [vmem:[#allocation10 + $0x2c] sm:$0xf]
    %v491 = vld [vmem:[#allocation10 + $0x30] sm:$0xf]
    %v492 = vld [vmem:[#allocation10 + $0x34] sm:$0xf]
    %v493 = vld [vmem:[#allocation10 + $0x38] sm:$0xf]
    %v494 = vld [vmem:[#allocation10 + $0x3c] sm:$0xf]
    %v511 = vunpack.c.l.b16 %v479
    %v512 = vunpack.c.l.b16 %v480
    %v513 = vunpack.c.l.b16 %v481
    %v514 = vunpack.c.l.b16 %v482
    %v515 = vunpack.c.l.b16 %v483
    %v516 = vunpack.c.l.b16 %v484
    %v517 = vunpack.c.l.b16 %v485
    %v518 = vunpack.c.l.b16 %v486
    %v519 = vunpack.c.l.b16 %v487
    %v520 = vunpack.c.l.b16 %v488
    %v521 = vunpack.c.l.b16 %v489
    %v522 = vunpack.c.l.b16 %v490
    %v523 = vunpack.c.l.b16 %v491
    %v524 = vunpack.c.l.b16 %v492
    %v525 = vunpack.c.l.b16 %v493
    %v526 = vunpack.c.l.b16 %v494
    %v527 = vpack.c.b16 %v512, %v511
    %v528 = vpack.c.b16 %v514, %v513
    %v529 = vpack.c.b16 %v516, %v515
    %v530 = vpack.c.b16 %v518, %v517
    %v531 = vpack.c.b16 %v520, %v519
    %v532 = vpack.c.b16 %v522, %v521
    %v533 = vpack.c.b16 %v524, %v523
    %v534 = vpack.c.b16 %v526, %v525
    %543 = vmatprep.subr.bf16.mxu0 0
    %544 = vmatpush1.bf16.msra.mxu0 %v534
    %545 = vmatprep.subr.bf16.mxu0 0
    %546 = vmatpush1.bf16.msra.mxu0 %v533
    %547 = vmatprep.subr.bf16.mxu0 0
    %548 = vmatpush1.bf16.msra.mxu0 %v532
    %549 = vmatprep.subr.bf16.mxu0 0
    %550 = vmatpush1.bf16.msra.mxu0 %v531
    %551 = vmatprep.subr.bf16.mxu0 0
    %552 = vmatpush1.bf16.msra.mxu0 %v530
    %553 = vmatprep.subr.bf16.mxu0 0
    %554 = vmatpush1.bf16.msra.mxu0 %v529
    %555 = vmatprep.subr.bf16.mxu0 0
    %556 = vmatpush1.bf16.msra.mxu0 %v528
    %557 = vmatprep.subr.bf16.mxu0 0
    %558 = vmatpush1.bf16.msra.mxu0 %v527
    %559 = vmatprep.subr.bf16.mxu0 0
    %560 = vmatpush2.bf16.msra.mxu0 0
    %561 = vmatprep.subr.bf16.mxu0 0
    %562 = vmatpush2.bf16.msra.mxu0 0
    %563 = vmatprep.subr.bf16.mxu0 0
    %564 = vmatpush2.bf16.msra.mxu0 0
    %565 = vmatprep.subr.bf16.mxu0 0
    %566 = vmatpush2.bf16.msra.mxu0 0
    %567 = vmatprep.subr.bf16.mxu0 0
    %568 = vmatpush2.bf16.msra.mxu0 0
    %569 = vmatprep.subr.bf16.mxu0 0
    %570 = vmatpush2.bf16.msra.mxu0 0
    %571 = vmatprep.subr.bf16.mxu0 0
    %572 = vmatpush2.bf16.msra.mxu0 0
    %573 = vmatprep.subr.bf16.mxu0 0
    %574 = vmatpush2.bf16.msra.mxu0 0
    %575 = vmatprep.mubr.bf16.mxu0 0
    %576 = vmatmul.mubr.bf16.gmra.mxu0 %v478
    %v577 = vpop.f32.mrf.mxu0
    %v578 = vadd.f32 0.0, %v577
    %v579 = vpop.f32.mrf.mxu0
    %v580 = vpop.f32.mrf.mxu0
    %v581 = vadd.f32 0.0, %v580
    %v582 = vpop.f32.mrf.mxu0
    %583 = vdwg.mxu0
    %v584 = vmax.f32 %v578, 1e-37
    %v585 = vmax.f32 %v581, 1e-37
    %v586 = vrcp.pop %v584
    %v587 = vrcp.pop %v585
    %v588 = vmul.f32 %v584, %v586
    %v589 = vmul.f32 %v585, %v587
    %v590 = vsub.f32 2.0, %v588
    %v591 = vsub.f32 2.0, %v589
    %v592 = vmul.f32 %v586, %v590
    %v593 = vmul.f32 %v587, %v591
    %v594 = vpack.c.bf16 %v593, %v592
    %v595 = vld [vmem:[#allocation11] sm:$0xf]
    %v596 = vld [vmem:[#allocation11 + $0x4] sm:$0xf]
    %v597 = vld [vmem:[#allocation11 + $0x8] sm:$0xf]
    %v598 = vld [vmem:[#allocation11 + $0xc] sm:$0xf]
    %v599 = vld [vmem:[#allocation11 + $0x10] sm:$0xf]
    %v600 = vld [vmem:[#allocation11 + $0x14] sm:$0xf]
    %v601 = vld [vmem:[#allocation11 + $0x18] sm:$0xf]
    %v602 = vld [vmem:[#allocation11 + $0x1c] sm:$0xf]
    %v603 = vld [vmem:[#allocation11 + $0x20] sm:$0xf]
    %v604 = vld [vmem:[#allocation11 + $0x24] sm:$0xf]
    %v605 = vld [vmem:[#allocation11 + $0x28] sm:$0xf]
    %v606 = vld [vmem:[#allocation11 + $0x2c] sm:$0xf]
    %v607 = vld [vmem:[#allocation11 + $0x30] sm:$0xf]
    %v608 = vld [vmem:[#allocation11 + $0x34] sm:$0xf]
    %v609 = vld [vmem:[#allocation11 + $0x38] sm:$0xf]
    %v610 = vld [vmem:[#allocation11 + $0x3c] sm:$0xf]
    %v627 = vunpack.c.l.b16 %v595
    %v628 = vunpack.c.l.b16 %v596
    %v629 = vunpack.c.l.b16 %v597
    %v630 = vunpack.c.l.b16 %v598
    %v631 = vunpack.c.l.b16 %v599
    %v632 = vunpack.c.l.b16 %v600
    %v633 = vunpack.c.l.b16 %v601
    %v634 = vunpack.c.l.b16 %v602
    %v635 = vunpack.c.l.b16 %v603
    %v636 = vunpack.c.l.b16 %v604
    %v637 = vunpack.c.l.b16 %v605
    %v638 = vunpack.c.l.b16 %v606
    %v639 = vunpack.c.l.b16 %v607
    %v640 = vunpack.c.l.b16 %v608
    %v641 = vunpack.c.l.b16 %v609
    %v642 = vunpack.c.l.b16 %v610
    %v643 = vpack.c.b16 %v628, %v627
    %v644 = vpack.c.b16 %v630, %v629
    %v645 = vpack.c.b16 %v632, %v631
    %v646 = vpack.c.b16 %v634, %v633
    %v647 = vpack.c.b16 %v636, %v635
    %v648 = vpack.c.b16 %v638, %v637
    %v649 = vpack.c.b16 %v640, %v639
    %v650 = vpack.c.b16 %v642, %v641
    %659 = vmatprep.subr.bf16.mxu0 0
    %660 = vmatpush1.bf16.msra.mxu0 %v650
    %661 = vmatprep.subr.bf16.mxu0 0
    %662 = vmatpush1.bf16.msra.mxu0 %v649
    %663 = vmatprep.subr.bf16.mxu0 0
    %664 = vmatpush1.bf16.msra.mxu0 %v648
    %665 = vmatprep.subr.bf16.mxu0 0
    %666 = vmatpush1.bf16.msra.mxu0 %v647
    %667 = vmatprep.subr.bf16.mxu0 0
    %668 = vmatpush1.bf16.msra.mxu0 %v646
    %669 = vmatprep.subr.bf16.mxu0 0
    %670 = vmatpush1.bf16.msra.mxu0 %v645
    %671 = vmatprep.subr.bf16.mxu0 0
    %672 = vmatpush1.bf16.msra.mxu0 %v644
    %673 = vmatprep.subr.bf16.mxu0 0
    %674 = vmatpush1.bf16.msra.mxu0 %v643
    %675 = vmatprep.subr.bf16.mxu0 0
    %676 = vmatpush2.bf16.msra.mxu0 0
    %677 = vmatprep.subr.bf16.mxu0 0
    %678 = vmatpush2.bf16.msra.mxu0 0
    %679 = vmatprep.subr.bf16.mxu0 0
    %680 = vmatpush2.bf16.msra.mxu0 0
    %681 = vmatprep.subr.bf16.mxu0 0
    %682 = vmatpush2.bf16.msra.mxu0 0
    %683 = vmatprep.subr.bf16.mxu0 0
    %684 = vmatpush2.bf16.msra.mxu0 0
    %685 = vmatprep.subr.bf16.mxu0 0
    %686 = vmatpush2.bf16.msra.mxu0 0
    %687 = vmatprep.subr.bf16.mxu0 0
    %688 = vmatpush2.bf16.msra.mxu0 0
    %689 = vmatprep.subr.bf16.mxu0 0
    %690 = vmatpush2.bf16.msra.mxu0 0
    %691 = vmatprep.mubr.bf16.mxu0 0
    %692 = vmatmul.mubr.bf16.gmra.mxu0 %v594
    %v693 = vpop.f32.mrf.mxu0
    %v694 = vadd.f32 0.0, %v693
    %v695 = vpop.f32.mrf.mxu0
    %v696 = vpop.f32.mrf.mxu0
    %v697 = vadd.f32 0.0, %v696
    %v698 = vpop.f32.mrf.mxu0
    %699 = vdwg.mxu0
    %v700 = vmul.f32 %v475, %v694
    %v701 = vmul.f32 %v477, %v697
    %702 = vst [vmem:[#allocation13] sm:$0xff] %v700
    %703 = vst [vmem:[#allocation13 + $0x8] sm:$0xff] %v701
    // Predicated region
    $region62: #{tpu_custom_call.1} parent=1 // pred_check
      _
    $region63: #{tpu_custom_call.1} parent=1 // pred_check_branch
      %705 = sbr.rel (0) target = $region65
    $region64: #{tpu_custom_call.1} parent=1 // pred_region
      %s707 = ssub.s32 256, 256
      %708 = vsyncadd [#allocation4], %s707
      %s709 = sshll.u32 [#allocation13], 4
      %s710 = int_to_ptr.vmem [resolvable:$true] %s709
      %715 = dma.vmem_to_hbm [thread:$0]  %s710, 256, %s9, [#allocation4], 128, 128, 8
    $region65: #{tpu_custom_call.1} parent=1 // pred_fallthru
      _
    // Predicated region
    $region66: #{tpu_custom_call.1} parent=1 // pred_check
      _
    $region67: #{tpu_custom_call.1} parent=1 // pred_check_branch
      %717 = sbr.rel (0) target = $region69
    $region68: #{tpu_custom_call.1} parent=1 // pred_region
      %718 = dma.done [#allocation4], 256
    $region69: #{tpu_custom_call.1} parent=1 // pred_fallthru
      _
    %719 = vsyncpa [#allocation3], 1
    %720 = vsyncpa [#allocation6], 1
    %721 = vsyncpa [#allocation9], 1
    %722 = vsyncpa [#allocation12], 1
    %723 = vsyncpa [#allocation4], 1

// kernel: tpu_custom_call.1
$region0: #{tpu_custom_call.1}
  #allocation0 [shape = 'u32[]', space=smem, size = 0x4, offset = 0x4, fixed_abs, tag = 'smem constant byte address 0x4 - core index']
  #allocation1 [shape = 'u32[144,128]{1,0:T(1,128)}', space=vmem, size = 0x12000, scoped, tag = 'internal scratch']
  %s0 = inlined_call_operand.hbm [shape: bf16[16,128], index: 0, kind: input, shape index: {}]
  %s1 = inlined_call_operand.hbm [shape: bf16[128,128], index: 1, kind: input, shape index: {}]
  %s2 = inlined_call_operand.vmem [shape: f32[1,128], index: 2, kind: input, shape index: {}]
  %s3 = inlined_call_operand.hbm [shape: bf16[128,128], index: 3, kind: input, shape index: {}]
  %s4 = inlined_call_operand.vmem [shape: f32[1,128], index: 4, kind: input, shape index: {}]
  %s5 = inlined_call_operand.hbm [shape: bf16[128,128], index: 5, kind: input, shape index: {}]
  %s6 = inlined_call_operand.vmem [shape: f32[1,128], index: 6, kind: input, shape index: {}]
  %s7 = inlined_call_operand.hbm [shape: bf16[128,128], index: 7, kind: input, shape index: {}]
  %s8 = inlined_call_operand.hbm [shape: bf16[128,128], index: 8, kind: input, shape index: {}]
  %s9 = inlined_call_operand.hbm [shape: f32[16,128], index: 9, kind: output, shape index: {}]
  %s10 = sld [smem:[#allocation0]]
  $region70: #{tpu_custom_call.1} parent=0
    _
  %s12 = ssub.s32 1, %s10
  %s13 = scalar_select 0, %s12, %s10
  $region1: #{tpu_custom_call.1} parent=0
    #allocation2 [shape = 'u8[4096]{0}', space=vmem, size = 0x1000, scoped, tag = 'input window, operand 0, single buffered']
    #allocation3 [shape = 's32[1]{0}', space=sflag, size = 0x4, scoped, tag = 'scoped memory for tpu_custom_call.1']
    #allocation4 [shape = 's32[1]{0}', space=sflag, size = 0x4, scoped, tag = 'scoped memory for tpu_custom_call.1']
    #allocation5 [shape = 'u8[32768]{0}', space=vmem, size = 0x8000, scoped, tag = 'input window, operand 1, single buffered']
    #allocation6 [shape = 's32[1]{0}', space=sflag, size = 0x4, scoped, tag = 'scoped memory for tpu_custom_call.1']
    #allocation7 [shape = 'u8[32768]{0}', space=vmem, size = 0x8000, scoped, tag = 'input window, operand 3, single buffered']
    #allocation8 [shape = 'u8[32768]{0}', space=vmem, size = 0x8000, scoped, tag = 'input window, operand 5, single buffered']
    #allocation9 [shape = 's32[1]{0}', space=sflag, size = 0x4, scoped, tag = 'scoped memory for tpu_custom_call.1']
    #allocation10 [shape = 'u8[32768]{0}', space=vmem, size = 0x8000, scoped, tag = 'input window, operand 7, single buffered']
    #allocation11 [shape = 'u8[32768]{0}', space=vmem, size = 0x8000, scoped, tag = 'input window, operand 8, single buffered']
    #allocation12 [shape = 's32[1]{0}', space=sflag, size = 0x4, scoped, tag = 'scoped memory for tpu_custom_call.1']
    #allocation13 [shape = 'u8[8192]{0}', space=vmem, size = 0x2000, scoped, tag = 'output window, operand 0, single buffered']
    %14 = vsyncpa [#allocation3], 0
    %15 = vsyncpa [#allocation6], 0
    %16 = vsyncpa [#allocation9], 0
    %17 = vsyncpa [#allocation12], 0
    %18 = vsyncpa [#allocation4], 0
    // Predicated region
    $region2: #{tpu_custom_call.1} parent=1 // pred_check
      _
    $region3: #{tpu_custom_call.1} parent=1 // pred_check_branch
      %20 = sbr.rel (0) target = $region5
    $region4: #{tpu_custom_call.1} parent=1 // pred_region
      %s22 = ssub.s32 128, 128
      %23 = vsyncadd [#allocation3], %s22
      %s24 = sshll.u32 [#allocation2], 4
      %s25 = int_to_ptr.vmem [resolvable:$true] %s24
      %30 = dma.hbm_to_vmem [thread:$0]  %s0, 128, %s25, [#allocation3], 64, 64, 4
    $region5: #{tpu_custom_call.1} parent=1 // pred_fallthru
      _
    // Predicated region
    $region6: #{tpu_custom_call.1} parent=1 // pred_check
      _
    $region7: #{tpu_custom_call.1} parent=1 // pred_check_branch
      %32 = sbr.rel (0) target = $region9
    $region8: #{tpu_custom_call.1} parent=1 // pred_region
      %s34 = ssub.s32 1024, 1024
      %35 = vsyncadd [#allocation6], %s34
      %s36 = sshll.u32 [#allocation5], 4
      %s37 = int_to_ptr.vmem [resolvable:$true] %s36
      %42 = dma.hbm_to_vmem [thread:$0]  %s1, 1024, %s37, [#allocation6], 64, 64, 4
    $region9: #{tpu_custom_call.1} parent=1 // pred_fallthru
      _
    // Predicated region
    $region10: #{tpu_custom_call.1} parent=1 // pred_check
      _
    $region11: #{tpu_custom_call.1} parent=1 // pred_check_branch
      %44 = sbr.rel (0) target = $region13
    $region12: #{tpu_custom_call.1} parent=1 // pred_region
      _
    $region13: #{tpu_custom_call.1} parent=1 // pred_fallthru
      _
    // Predicated region
    $region14: #{tpu_custom_call.1} parent=1 // pred_check
      _
    $region15: #{tpu_custom_call.1} parent=1 // pred_check_branch
      %46 = sbr.rel (0) target = $region17
    $region16: #{tpu_custom_call.1} parent=1 // pred_region
      %s48 = ssub.s32 1024, 1024
      %49 = vsyncadd [#allocation6], %s48
      %s50 = sshll.u32 [#allocation7], 4
      %s51 = int_to_ptr.vmem [resolvable:$true] %s50
      %56 = dma.hbm_to_vmem [thread:$0]  %s3, 1024, %s51, [#allocation6], 64, 64, 4
    $region17: #{tpu_custom_call.1} parent=1 // pred_fallthru
      _
    // Predicated region
    $region18: #{tpu_custom_call.1} parent=1 // pred_check
      _
    $region19: #{tpu_custom_call.1} parent=1 // pred_check_branch
      %58 = sbr.rel (0) target = $region21
    $region20: #{tpu_custom_call.1} parent=1 // pred_region
      _
    $region21: #{tpu_custom_call.1} parent=1 // pred_fallthru
      _
    // Predicated region
    $region22: #{tpu_custom_call.1} parent=1 // pred_check
      _
    $region23: #{tpu_custom_call.1} parent=1 // pred_check_branch
      %60 = sbr.rel (0) target = $region25
    $region24: #{tpu_custom_call.1} parent=1 // pred_region
      %s62 = ssub.s32 1024, 1024
      %63 = vsyncadd [#allocation9], %s62
      %s64 = sshll.u32 [#allocation8], 4
      %s65 = int_to_ptr.vmem [resolvable:$true] %s64
      %70 = dma.hbm_to_vmem [thread:$0]  %s5, 1024, %s65, [#allocation9], 64, 64, 4
    $region25: #{tpu_custom_call.1} parent=1 // pred_fallthru
      _
    // Predicated region
    $region26: #{tpu_custom_call.1} parent=1 // pred_check
      _
    $region27: #{tpu_custom_call.1} parent=1 // pred_check_branch
      %72 = sbr.rel (0) target = $region29
    $region28: #{tpu_custom_call.1} parent=1 // pred_region
      _
    $region29: #{tpu_custom_call.1} parent=1 // pred_fallthru
      _
    // Predicated region
    $region30: #{tpu_custom_call.1} parent=1 // pred_check
      _
    $region31: #{tpu_custom_call.1} parent=1 // pred_check_branch
      %74 = sbr.rel (0) target = $region33
    $region32: #{tpu_custom_call.1} parent=1 // pred_region
      %s76 = ssub.s32 1024, 1024
      %77 = vsyncadd [#allocation9], %s76
      %s78 = sshll.u32 [#allocation10], 4
      %s79 = int_to_ptr.vmem [resolvable:$true] %s78
      %84 = dma.hbm_to_vmem [thread:$0]  %s7, 1024, %s79, [#allocation9], 64, 64, 4
    $region33: #{tpu_custom_call.1} parent=1 // pred_fallthru
      _
    // Predicated region
    $region34: #{tpu_custom_call.1} parent=1 // pred_check
      _
    $region35: #{tpu_custom_call.1} parent=1 // pred_check_branch
      %86 = sbr.rel (0) target = $region37
    $region36: #{tpu_custom_call.1} parent=1 // pred_region
      %s88 = ssub.s32 1024, 1024
      %89 = vsyncadd [#allocation12], %s88
      %s90 = sshll.u32 [#allocation11], 4
      %s91 = int_to_ptr.vmem [resolvable:$true] %s90
      %96 = dma.hbm_to_vmem [thread:$0]  %s8, 1024, %s91, [#allocation12], 64, 64, 4
    $region37: #{tpu_custom_call.1} parent=1 // pred_fallthru
      _
    // Predicated region
    $region38: #{tpu_custom_call.1} parent=1 // pred_check
      _
    $region39: #{tpu_custom_call.1} parent=1 // pred_check_branch
      %98 = sbr.rel (0) target = $region41
    $region40: #{tpu_custom_call.1} parent=1 // pred_region
      %99 = dma.done [#allocation3], 128
    $region41: #{tpu_custom_call.1} parent=1 // pred_fallthru
      _
    // Predicated region
    $region42: #{tpu_custom_call.1} parent=1 // pred_check
      _
    $region43: #{tpu_custom_call.1} parent=1 // pred_check_branch
      %101 = sbr.rel (0) target = $region45
    $region44: #{tpu_custom_call.1} parent=1 // pred_region
      %102 = dma.done [#allocation6], 1024
    $region45: #{tpu_custom_call.1} parent=1 // pred_fallthru
      _
    // Predicated region
    $region46: #{tpu_custom_call.1} parent=1 // pred_check
      _
    $region47: #{tpu_custom_call.1} parent=1 // pred_check_branch
      %104 = sbr.rel (0) target = $region49
    $region48: #{tpu_custom_call.1} parent=1 // pred_region
      %105 = dma.done [#allocation6], 1024
    $region49: #{tpu_custom_call.1} parent=1 // pred_fallthru
      _
    // Predicated region
    $region50: #{tpu_custom_call.1} parent=1 // pred_check
      _
    $region51: #{tpu_custom_call.1} parent=1 // pred_check_branch
      %107 = sbr.rel (0) target = $region53
    $region52: #{tpu_custom_call.1} parent=1 // pred_region
      %108 = dma.done [#allocation9], 1024
    $region53: #{tpu_custom_call.1} parent=1 // pred_fallthru
      _
    // Predicated region
    $region54: #{tpu_custom_call.1} parent=1 // pred_check
      _
    $region55: #{tpu_custom_call.1} parent=1 // pred_check_branch
      %110 = sbr.rel (0) target = $region57
    $region56: #{tpu_custom_call.1} parent=1 // pred_region
      %111 = dma.done [#allocation9], 1024
    $region57: #{tpu_custom_call.1} parent=1 // pred_fallthru
      _
    // Predicated region
    $region58: #{tpu_custom_call.1} parent=1 // pred_check
      _
    $region59: #{tpu_custom_call.1} parent=1 // pred_check_branch
      %113 = sbr.rel (0) target = $region61
    $region60: #{tpu_custom_call.1} parent=1 // pred_region
      %114 = dma.done [#allocation12], 1024
    $region61: #{tpu_custom_call.1} parent=1 // pred_fallthru
      _
    %v116 = vld [vmem:[#allocation2] sm:$0xf]
    %v117 = vld [vmem:[#allocation2 + $0x4] sm:$0xf]
    %v118 = vld [vmem:[#allocation5] sm:$0xf]
    %v119 = vld [vmem:[#allocation5 + $0x4] sm:$0xf]
    %v120 = vld [vmem:[#allocation5 + $0x8] sm:$0xf]
    %v121 = vld [vmem:[#allocation5 + $0xc] sm:$0xf]
    %v122 = vld [vmem:[#allocation5 + $0x10] sm:$0xf]
    %v123 = vld [vmem:[#allocation5 + $0x14] sm:$0xf]
    %v124 = vld [vmem:[#allocation5 + $0x18] sm:$0xf]
    %v125 = vld [vmem:[#allocation5 + $0x1c] sm:$0xf]
    %v126 = vld [vmem:[#allocation5 + $0x20] sm:$0xf]
    %v127 = vld [vmem:[#allocation5 + $0x24] sm:$0xf]
    %v128 = vld [vmem:[#allocation5 + $0x28] sm:$0xf]
    %v129 = vld [vmem:[#allocation5 + $0x2c] sm:$0xf]
    %v130 = vld [vmem:[#allocation5 + $0x30] sm:$0xf]
    %v131 = vld [vmem:[#allocation5 + $0x34] sm:$0xf]
    %v132 = vld [vmem:[#allocation5 + $0x38] sm:$0xf]
    %v133 = vld [vmem:[#allocation5 + $0x3c] sm:$0xf]
    %v134 = vld [vmem:[%s2] sm:$0x1]
    %v136 = vlaneseq
    %v137 = vshrl.u32 %v136, 7
    %v138 = vsub.s32 0, %v137
    %v139 = vrot.slane %v134, %v138
    %v143 = vunpack.c.l.b16 %v116
    %v144 = vunpack.c.l.b16 %v117
    %v145 = vpack.c.b16 %v144, %v143
    %v163 = vunpack.c.l.b16 %v118
    %v164 = vunpack.c.l.b16 %v119
    %v165 = vunpack.c.l.b16 %v120
    %v166 = vunpack.c.l.b16 %v121
    %v167 = vunpack.c.l.b16 %v122
    %v168 = vunpack.c.l.b16 %v123
    %v169 = vunpack.c.l.b16 %v124
    %v170 = vunpack.c.l.b16 %v125
    %v171 = vunpack.c.l.b16 %v126
    %v172 = vunpack.c.l.b16 %v127
    %v173 = vunpack.c.l.b16 %v128
    %v174 = vunpack.c.l.b16 %v129
    %v175 = vunpack.c.l.b16 %v130
    %v176 = vunpack.c.l.b16 %v131
    %v177 = vunpack.c.l.b16 %v132
    %v178 = vunpack.c.l.b16 %v133
    %v179 = vpack.c.b16 %v164, %v163
    %v180 = vpack.c.b16 %v166, %v165
    %v181 = vpack.c.b16 %v168, %v167
    %v182 = vpack.c.b16 %v170, %v169
    %v183 = vpack.c.b16 %v172, %v171
    %v184 = vpack.c.b16 %v174, %v173
    %v185 = vpack.c.b16 %v176, %v175
    %v186 = vpack.c.b16 %v178, %v177
    %195 = vmatprep.subr.bf16.mxu0 0
    %196 = vmatpush1.bf16.msra.mxu0 %v186
    %197 = vmatprep.subr.bf16.mxu0 0
    %198 = vmatpush1.bf16.msra.mxu0 %v185
    %199 = vmatprep.subr.bf16.mxu0 0
    %200 = vmatpush1.bf16.msra.mxu0 %v184
    %201 = vmatprep.subr.bf16.mxu0 0
    %202 = vmatpush1.bf16.msra.mxu0 %v183
    %203 = vmatprep.subr.bf16.mxu0 0
    %204 = vmatpush1.bf16.msra.mxu0 %v182
    %205 = vmatprep.subr.bf16.mxu0 0
    %206 = vmatpush1.bf16.msra.mxu0 %v181
    %207 = vmatprep.subr.bf16.mxu0 0
    %208 = vmatpush1.bf16.msra.mxu0 %v180
    %209 = vmatprep.subr.bf16.mxu0 0
    %210 = vmatpush1.bf16.msra.mxu0 %v179
    %211 = vmatprep.subr.bf16.mxu0 0
    %212 = vmatpush2.bf16.msra.mxu0 0
    %213 = vmatprep.subr.bf16.mxu0 0
    %214 = vmatpush2.bf16.msra.mxu0 0
    %215 = vmatprep.subr.bf16.mxu0 0
    %216 = vmatpush2.bf16.msra.mxu0 0
    %217 = vmatprep.subr.bf16.mxu0 0
    %218 = vmatpush2.bf16.msra.mxu0 0
    %219 = vmatprep.subr.bf16.mxu0 0
    %220 = vmatpush2.bf16.msra.mxu0 0
    %221 = vmatprep.subr.bf16.mxu0 0
    %222 = vmatpush2.bf16.msra.mxu0 0
    %223 = vmatprep.subr.bf16.mxu0 0
    %224 = vmatpush2.bf16.msra.mxu0 0
    %225 = vmatprep.subr.bf16.mxu0 0
    %226 = vmatpush2.bf16.msra.mxu0 0
    %227 = vmatprep.mubr.bf16.mxu0 0
    %228 = vmatmul.mubr.bf16.gmra.mxu0 %v145
    %v229 = vpop.f32.mrf.mxu0
    %v230 = vadd.f32 %v139, %v229
    %v231 = vpop.f32.mrf.mxu0
    %v232 = vpop.f32.mrf.mxu0
    %v233 = vadd.f32 %v139, %v232
    %v234 = vpop.f32.mrf.mxu0
    %235 = vdwg.mxu0
    %v236 = vmax.f32 %v230, 0.0
    %v237 = vmax.f32 %v233, 0.0
    %v238 = vpack.c.bf16 %v237, %v236
    %v239 = vld [vmem:[#allocation7] sm:$0xf]
    %v240 = vld [vmem:[#allocation7 + $0x4] sm:$0xf]
    %v241 = vld [vmem:[#allocation7 + $0x8] sm:$0xf]
    %v242 = vld [vmem:[#allocation7 + $0xc] sm:$0xf]
    %v243 = vld [vmem:[#allocation7 + $0x10] sm:$0xf]
    %v244 = vld [vmem:[#allocation7 + $0x14] sm:$0xf]
    %v245 = vld [vmem:[#allocation7 + $0x18] sm:$0xf]
    %v246 = vld [vmem:[#allocation7 + $0x1c] sm:$0xf]
    %v247 = vld [vmem:[#allocation7 + $0x20] sm:$0xf]
    %v248 = vld [vmem:[#allocation7 + $0x24] sm:$0xf]
    %v249 = vld [vmem:[#allocation7 + $0x28] sm:$0xf]
    %v250 = vld [vmem:[#allocation7 + $0x2c] sm:$0xf]
    %v251 = vld [vmem:[#allocation7 + $0x30] sm:$0xf]
    %v252 = vld [vmem:[#allocation7 + $0x34] sm:$0xf]
    %v253 = vld [vmem:[#allocation7 + $0x38] sm:$0xf]
    %v254 = vld [vmem:[#allocation7 + $0x3c] sm:$0xf]
    %v255 = vld [vmem:[%s4] sm:$0x1]
    %v257 = vlaneseq
    %v258 = vshrl.u32 %v257, 7
    %v259 = vsub.s32 0, %v258
    %v260 = vrot.slane %v255, %v259
    %v278 = vunpack.c.l.b16 %v239
    %v279 = vunpack.c.l.b16 %v240
    %v280 = vunpack.c.l.b16 %v241
    %v281 = vunpack.c.l.b16 %v242
    %v282 = vunpack.c.l.b16 %v243
    %v283 = vunpack.c.l.b16 %v244
    %v284 = vunpack.c.l.b16 %v245
    %v285 = vunpack.c.l.b16 %v246
    %v286 = vunpack.c.l.b16 %v247
    %v287 = vunpack.c.l.b16 %v248
    %v288 = vunpack.c.l.b16 %v249
    %v289 = vunpack.c.l.b16 %v250
    %v290 = vunpack.c.l.b16 %v251
    %v291 = vunpack.c.l.b16 %v252
    %v292 = vunpack.c.l.b16 %v253
    %v293 = vunpack.c.l.b16 %v254
    %v294 = vpack.c.b16 %v279, %v278
    %v295 = vpack.c.b16 %v281, %v280
    %v296 = vpack.c.b16 %v283, %v282
    %v297 = vpack.c.b16 %v285, %v284
    %v298 = vpack.c.b16 %v287, %v286
    %v299 = vpack.c.b16 %v289, %v288
    %v300 = vpack.c.b16 %v291, %v290
    %v301 = vpack.c.b16 %v293, %v292
    %310 = vmatprep.subr.bf16.mxu0 0
    %311 = vmatpush1.bf16.msra.mxu0 %v301
    %312 = vmatprep.subr.bf16.mxu0 0
    %313 = vmatpush1.bf16.msra.mxu0 %v300
    %314 = vmatprep.subr.bf16.mxu0 0
    %315 = vmatpush1.bf16.msra.mxu0 %v299
    %316 = vmatprep.subr.bf16.mxu0 0
    %317 = vmatpush1.bf16.msra.mxu0 %v298
    %318 = vmatprep.subr.bf16.mxu0 0
    %319 = vmatpush1.bf16.msra.mxu0 %v297
    %320 = vmatprep.subr.bf16.mxu0 0
    %321 = vmatpush1.bf16.msra.mxu0 %v296
    %322 = vmatprep.subr.bf16.mxu0 0
    %323 = vmatpush1.bf16.msra.mxu0 %v295
    %324 = vmatprep.subr.bf16.mxu0 0
    %325 = vmatpush1.bf16.msra.mxu0 %v294
    %326 = vmatprep.subr.bf16.mxu0 0
    %327 = vmatpush2.bf16.msra.mxu0 0
    %328 = vmatprep.subr.bf16.mxu0 0
    %329 = vmatpush2.bf16.msra.mxu0 0
    %330 = vmatprep.subr.bf16.mxu0 0
    %331 = vmatpush2.bf16.msra.mxu0 0
    %332 = vmatprep.subr.bf16.mxu0 0
    %333 = vmatpush2.bf16.msra.mxu0 0
    %334 = vmatprep.subr.bf16.mxu0 0
    %335 = vmatpush2.bf16.msra.mxu0 0
    %336 = vmatprep.subr.bf16.mxu0 0
    %337 = vmatpush2.bf16.msra.mxu0 0
    %338 = vmatprep.subr.bf16.mxu0 0
    %339 = vmatpush2.bf16.msra.mxu0 0
    %340 = vmatprep.subr.bf16.mxu0 0
    %341 = vmatpush2.bf16.msra.mxu0 0
    %342 = vmatprep.mubr.bf16.mxu0 0
    %343 = vmatmul.mubr.bf16.gmra.mxu0 %v238
    %v344 = vpop.f32.mrf.mxu0
    %v345 = vadd.f32 %v260, %v344
    %v346 = vpop.f32.mrf.mxu0
    %v347 = vpop.f32.mrf.mxu0
    %v348 = vadd.f32 %v260, %v347
    %v349 = vpop.f32.mrf.mxu0
    %350 = vdwg.mxu0
    %v351 = vmax.f32 %v345, 0.0
    %v352 = vmax.f32 %v348, 0.0
    %v353 = vpack.c.bf16 %v352, %v351
    %v354 = vld [vmem:[#allocation8] sm:$0xf]
    %v355 = vld [vmem:[#allocation8 + $0x4] sm:$0xf]
    %v356 = vld [vmem:[#allocation8 + $0x8] sm:$0xf]
    %v357 = vld [vmem:[#allocation8 + $0xc] sm:$0xf]
    %v358 = vld [vmem:[#allocation8 + $0x10] sm:$0xf]
    %v359 = vld [vmem:[#allocation8 + $0x14] sm:$0xf]
    %v360 = vld [vmem:[#allocation8 + $0x18] sm:$0xf]
    %v361 = vld [vmem:[#allocation8 + $0x1c] sm:$0xf]
    %v362 = vld [vmem:[#allocation8 + $0x20] sm:$0xf]
    %v363 = vld [vmem:[#allocation8 + $0x24] sm:$0xf]
    %v364 = vld [vmem:[#allocation8 + $0x28] sm:$0xf]
    %v365 = vld [vmem:[#allocation8 + $0x2c] sm:$0xf]
    %v366 = vld [vmem:[#allocation8 + $0x30] sm:$0xf]
    %v367 = vld [vmem:[#allocation8 + $0x34] sm:$0xf]
    %v368 = vld [vmem:[#allocation8 + $0x38] sm:$0xf]
    %v369 = vld [vmem:[#allocation8 + $0x3c] sm:$0xf]
    %v370 = vld [vmem:[%s6] sm:$0x1]
    %v372 = vlaneseq
    %v373 = vshrl.u32 %v372, 7
    %v374 = vsub.s32 0, %v373
    %v375 = vrot.slane %v370, %v374
    %v393 = vunpack.c.l.b16 %v354
    %v394 = vunpack.c.l.b16 %v355
    %v395 = vunpack.c.l.b16 %v356
    %v396 = vunpack.c.l.b16 %v357
    %v397 = vunpack.c.l.b16 %v358
    %v398 = vunpack.c.l.b16 %v359
    %v399 = vunpack.c.l.b16 %v360
    %v400 = vunpack.c.l.b16 %v361
    %v401 = vunpack.c.l.b16 %v362
    %v402 = vunpack.c.l.b16 %v363
    %v403 = vunpack.c.l.b16 %v364
    %v404 = vunpack.c.l.b16 %v365
    %v405 = vunpack.c.l.b16 %v366
    %v406 = vunpack.c.l.b16 %v367
    %v407 = vunpack.c.l.b16 %v368
    %v408 = vunpack.c.l.b16 %v369
    %v409 = vpack.c.b16 %v394, %v393
    %v410 = vpack.c.b16 %v396, %v395
    %v411 = vpack.c.b16 %v398, %v397
    %v412 = vpack.c.b16 %v400, %v399
    %v413 = vpack.c.b16 %v402, %v401
    %v414 = vpack.c.b16 %v404, %v403
    %v415 = vpack.c.b16 %v406, %v405
    %v416 = vpack.c.b16 %v408, %v407
    %425 = vmatprep.subr.bf16.mxu0 0
    %426 = vmatpush1.bf16.msra.mxu0 %v416
    %427 = vmatprep.subr.bf16.mxu0 0
    %428 = vmatpush1.bf16.msra.mxu0 %v415
    %429 = vmatprep.subr.bf16.mxu0 0
    %430 = vmatpush1.bf16.msra.mxu0 %v414
    %431 = vmatprep.subr.bf16.mxu0 0
    %432 = vmatpush1.bf16.msra.mxu0 %v413
    %433 = vmatprep.subr.bf16.mxu0 0
    %434 = vmatpush1.bf16.msra.mxu0 %v412
    %435 = vmatprep.subr.bf16.mxu0 0
    %436 = vmatpush1.bf16.msra.mxu0 %v411
    %437 = vmatprep.subr.bf16.mxu0 0
    %438 = vmatpush1.bf16.msra.mxu0 %v410
    %439 = vmatprep.subr.bf16.mxu0 0
    %440 = vmatpush1.bf16.msra.mxu0 %v409
    %441 = vmatprep.subr.bf16.mxu0 0
    %442 = vmatpush2.bf16.msra.mxu0 0
    %443 = vmatprep.subr.bf16.mxu0 0
    %444 = vmatpush2.bf16.msra.mxu0 0
    %445 = vmatprep.subr.bf16.mxu0 0
    %446 = vmatpush2.bf16.msra.mxu0 0
    %447 = vmatprep.subr.bf16.mxu0 0
    %448 = vmatpush2.bf16.msra.mxu0 0
    %449 = vmatprep.subr.bf16.mxu0 0
    %450 = vmatpush2.bf16.msra.mxu0 0
    %451 = vmatprep.subr.bf16.mxu0 0
    %452 = vmatpush2.bf16.msra.mxu0 0
    %453 = vmatprep.subr.bf16.mxu0 0
    %454 = vmatpush2.bf16.msra.mxu0 0
    %455 = vmatprep.subr.bf16.mxu0 0
    %456 = vmatpush2.bf16.msra.mxu0 0
    %457 = vmatprep.mubr.bf16.mxu0 0
    %458 = vmatmul.mubr.bf16.gmra.mxu0 %v353
    %v459 = vpop.f32.mrf.mxu0
    %v460 = vadd.f32 %v375, %v459
    %v461 = vpop.f32.mrf.mxu0
    %v462 = vpop.f32.mrf.mxu0
    %v463 = vadd.f32 %v375, %v462
    %v464 = vpop.f32.mrf.mxu0
    %465 = vdwg.mxu0
    %466 = vmax.xlane.f32.xlu0 %v460
    %v467 = vpop.xlane.xlu0 %466
    %468 = vmax.xlane.f32.xlu0 %v463
    %v469 = vpop.xlane.xlu0 %468
    %v470 = vsub.f32 %v460, %v467
    %v471 = vsub.f32 %v463, %v469
    %v472 = vmax.f32 %v470, -80.0
    %v473 = vmax.f32 %v471, -80.0
    %v474 = vmul.f32 %v472, 1.442695
    %v475 = vpow.pop %v474
    %v476 = vmul.f32 %v473, 1.442695
    %v477 = vpow.pop %v476
    %v478 = vpack.c.bf16 %v477, %v475
    %v479 = vld [vmem:[#allocation10] sm:$0xf]
    %v480 = vld [vmem:[#allocation10 + $0x4] sm:$0xf]
    %v481 = vld [vmem:[#allocation10 + $0x8] sm:$0xf]
    %v482 = vld [vmem:[#allocation10 + $0xc] sm:$0xf]
    %v483 = vld [vmem:[#allocation10 + $0x10] sm:$0xf]
    %v484 = vld [vmem:[#allocation10 + $0x14] sm:$0xf]
    %v485 = vld [vmem:[#allocation10 + $0x18] sm:$0xf]
    %v486 = vld [vmem:[#allocation10 + $0x1c] sm:$0xf]
    %v487 = vld [vmem:[#allocation10 + $0x20] sm:$0xf]
    %v488 = vld [vmem:[#allocation10 + $0x24] sm:$0xf]
    %v489 = vld [vmem:[#allocation10 + $0x28] sm:$0xf]
    %v490 = vld [vmem:[#allocation10 + $0x2c] sm:$0xf]
    %v491 = vld [vmem:[#allocation10 + $0x30] sm:$0xf]
    %v492 = vld [vmem:[#allocation10 + $0x34] sm:$0xf]
    %v493 = vld [vmem:[#allocation10 + $0x38] sm:$0xf]
    %v494 = vld [vmem:[#allocation10 + $0x3c] sm:$0xf]
    %v511 = vunpack.c.l.b16 %v479
    %v512 = vunpack.c.l.b16 %v480
    %v513 = vunpack.c.l.b16 %v481
    %v514 = vunpack.c.l.b16 %v482
    %v515 = vunpack.c.l.b16 %v483
    %v516 = vunpack.c.l.b16 %v484
    %v517 = vunpack.c.l.b16 %v485
    %v518 = vunpack.c.l.b16 %v486
    %v519 = vunpack.c.l.b16 %v487
    %v520 = vunpack.c.l.b16 %v488
    %v521 = vunpack.c.l.b16 %v489
    %v522 = vunpack.c.l.b16 %v490
    %v523 = vunpack.c.l.b16 %v491
    %v524 = vunpack.c.l.b16 %v492
    %v525 = vunpack.c.l.b16 %v493
    %v526 = vunpack.c.l.b16 %v494
    %v527 = vpack.c.b16 %v512, %v511
    %v528 = vpack.c.b16 %v514, %v513
    %v529 = vpack.c.b16 %v516, %v515
    %v530 = vpack.c.b16 %v518, %v517
    %v531 = vpack.c.b16 %v520, %v519
    %v532 = vpack.c.b16 %v522, %v521
    %v533 = vpack.c.b16 %v524, %v523
    %v534 = vpack.c.b16 %v526, %v525
    %543 = vmatprep.subr.bf16.mxu0 0
    %544 = vmatpush1.bf16.msra.mxu0 %v534
    %545 = vmatprep.subr.bf16.mxu0 0
    %546 = vmatpush1.bf16.msra.mxu0 %v533
    %547 = vmatprep.subr.bf16.mxu0 0
    %548 = vmatpush1.bf16.msra.mxu0 %v532
    %549 = vmatprep.subr.bf16.mxu0 0
    %550 = vmatpush1.bf16.msra.mxu0 %v531
    %551 = vmatprep.subr.bf16.mxu0 0
    %552 = vmatpush1.bf16.msra.mxu0 %v530
    %553 = vmatprep.subr.bf16.mxu0 0
    %554 = vmatpush1.bf16.msra.mxu0 %v529
    %555 = vmatprep.subr.bf16.mxu0 0
    %556 = vmatpush1.bf16.msra.mxu0 %v528
    %557 = vmatprep.subr.bf16.mxu0 0
    %558 = vmatpush1.bf16.msra.mxu0 %v527
    %559 = vmatprep.subr.bf16.mxu0 0
    %560 = vmatpush2.bf16.msra.mxu0 0
    %561 = vmatprep.subr.bf16.mxu0 0
    %562 = vmatpush2.bf16.msra.mxu0 0
    %563 = vmatprep.subr.bf16.mxu0 0
    %564 = vmatpush2.bf16.msra.mxu0 0
    %565 = vmatprep.subr.bf16.mxu0 0
    %566 = vmatpush2.bf16.msra.mxu0 0
    %567 = vmatprep.subr.bf16.mxu0 0
    %568 = vmatpush2.bf16.msra.mxu0 0
    %569 = vmatprep.subr.bf16.mxu0 0
    %570 = vmatpush2.bf16.msra.mxu0 0
    %571 = vmatprep.subr.bf16.mxu0 0
    %572 = vmatpush2.bf16.msra.mxu0 0
    %573 = vmatprep.subr.bf16.mxu0 0
    %574 = vmatpush2.bf16.msra.mxu0 0
    %575 = vmatprep.mubr.bf16.mxu0 0
    %576 = vmatmul.mubr.bf16.gmra.mxu0 %v478
    %v577 = vpop.f32.mrf.mxu0
    %v578 = vadd.f32 0.0, %v577
    %v579 = vpop.f32.mrf.mxu0
    %v580 = vpop.f32.mrf.mxu0
    %v581 = vadd.f32 0.0, %v580
    %v582 = vpop.f32.mrf.mxu0
    %583 = vdwg.mxu0
    %v584 = vmax.f32 %v578, 1e-37
    %v585 = vmax.f32 %v581, 1e-37
    %v586 = vrcp.pop %v584
    %v587 = vrcp.pop %v585
    %v588 = vmul.f32 %v584, %v586
    %v589 = vmul.f32 %v585, %v587
    %v590 = vsub.f32 2.0, %v588
    %v591 = vsub.f32 2.0, %v589
    %v592 = vmul.f32 %v586, %v590
    %v593 = vmul.f32 %v587, %v591
    %v594 = vpack.c.bf16 %v593, %v592
    %v595 = vld [vmem:[#allocation11] sm:$0xf]
    %v596 = vld [vmem:[#allocation11 + $0x4] sm:$0xf]
    %v597 = vld [vmem:[#allocation11 + $0x8] sm:$0xf]
    %v598 = vld [vmem:[#allocation11 + $0xc] sm:$0xf]
    %v599 = vld [vmem:[#allocation11 + $0x10] sm:$0xf]
    %v600 = vld [vmem:[#allocation11 + $0x14] sm:$0xf]
    %v601 = vld [vmem:[#allocation11 + $0x18] sm:$0xf]
    %v602 = vld [vmem:[#allocation11 + $0x1c] sm:$0xf]
    %v603 = vld [vmem:[#allocation11 + $0x20] sm:$0xf]
    %v604 = vld [vmem:[#allocation11 + $0x24] sm:$0xf]
    %v605 = vld [vmem:[#allocation11 + $0x28] sm:$0xf]
    %v606 = vld [vmem:[#allocation11 + $0x2c] sm:$0xf]
    %v607 = vld [vmem:[#allocation11 + $0x30] sm:$0xf]
    %v608 = vld [vmem:[#allocation11 + $0x34] sm:$0xf]
    %v609 = vld [vmem:[#allocation11 + $0x38] sm:$0xf]
    %v610 = vld [vmem:[#allocation11 + $0x3c] sm:$0xf]
    %v627 = vunpack.c.l.b16 %v595
    %v628 = vunpack.c.l.b16 %v596
    %v629 = vunpack.c.l.b16 %v597
    %v630 = vunpack.c.l.b16 %v598
    %v631 = vunpack.c.l.b16 %v599
    %v632 = vunpack.c.l.b16 %v600
    %v633 = vunpack.c.l.b16 %v601
    %v634 = vunpack.c.l.b16 %v602
    %v635 = vunpack.c.l.b16 %v603
    %v636 = vunpack.c.l.b16 %v604
    %v637 = vunpack.c.l.b16 %v605
    %v638 = vunpack.c.l.b16 %v606
    %v639 = vunpack.c.l.b16 %v607
    %v640 = vunpack.c.l.b16 %v608
    %v641 = vunpack.c.l.b16 %v609
    %v642 = vunpack.c.l.b16 %v610
    %v643 = vpack.c.b16 %v628, %v627
    %v644 = vpack.c.b16 %v630, %v629
    %v645 = vpack.c.b16 %v632, %v631
    %v646 = vpack.c.b16 %v634, %v633
    %v647 = vpack.c.b16 %v636, %v635
    %v648 = vpack.c.b16 %v638, %v637
    %v649 = vpack.c.b16 %v640, %v639
    %v650 = vpack.c.b16 %v642, %v641
    %659 = vmatprep.subr.bf16.mxu0 0
    %660 = vmatpush1.bf16.msra.mxu0 %v650
    %661 = vmatprep.subr.bf16.mxu0 0
    %662 = vmatpush1.bf16.msra.mxu0 %v649
    %663 = vmatprep.subr.bf16.mxu0 0
    %664 = vmatpush1.bf16.msra.mxu0 %v648
    %665 = vmatprep.subr.bf16.mxu0 0
    %666 = vmatpush1.bf16.msra.mxu0 %v647
    %667 = vmatprep.subr.bf16.mxu0 0
    %668 = vmatpush1.bf16.msra.mxu0 %v646
    %669 = vmatprep.subr.bf16.mxu0 0
    %670 = vmatpush1.bf16.msra.mxu0 %v645
    %671 = vmatprep.subr.bf16.mxu0 0
    %672 = vmatpush1.bf16.msra.mxu0 %v644
    %673 = vmatprep.subr.bf16.mxu0 0
    %674 = vmatpush1.bf16.msra.mxu0 %v643
    %675 = vmatprep.subr.bf16.mxu0 0
    %676 = vmatpush2.bf16.msra.mxu0 0
    %677 = vmatprep.subr.bf16.mxu0 0
    %678 = vmatpush2.bf16.msra.mxu0 0
    %679 = vmatprep.subr.bf16.mxu0 0
    %680 = vmatpush2.bf16.msra.mxu0 0
    %681 = vmatprep.subr.bf16.mxu0 0
    %682 = vmatpush2.bf16.msra.mxu0 0
    %683 = vmatprep.subr.bf16.mxu0 0
    %684 = vmatpush2.bf16.msra.mxu0 0
    %685 = vmatprep.subr.bf16.mxu0 0
    %686 = vmatpush2.bf16.msra.mxu0 0
    %687 = vmatprep.subr.bf16.mxu0 0
    %688 = vmatpush2.bf16.msra.mxu0 0
    %689 = vmatprep.subr.bf16.mxu0 0
    %690 = vmatpush2.bf16.msra.mxu0 0
    %691 = vmatprep.mubr.bf16.mxu0 0
    %692 = vmatmul.mubr.bf16.gmra.mxu0 %v594
    %v693 = vpop.f32.mrf.mxu0
    %v694 = vadd.f32 0.0, %v693
    %v695 = vpop.f32.mrf.mxu0
    %v696 = vpop.f32.mrf.mxu0
    %v697 = vadd.f32 0.0, %v696
    %v698 = vpop.f32.mrf.mxu0
    %699 = vdwg.mxu0
    %v700 = vmul.f32 %v475, %v694
    %v701 = vmul.f32 %v477, %v697
    %702 = vst [vmem:[#allocation13] sm:$0xff] %v700
    %703 = vst [vmem:[#allocation13 + $0x8] sm:$0xff] %v701
    // Predicated region
    $region62: #{tpu_custom_call.1} parent=1 // pred_check
      _
    $region63: #{tpu_custom_call.1} parent=1 // pred_check_branch
      %705 = sbr.rel (0) target = $region65
    $region64: #{tpu_custom_call.1} parent=1 // pred_region
      %s707 = ssub.s32 256, 256
      %708 = vsyncadd [#allocation4], %s707
      %s709 = sshll.u32 [#allocation13], 4
      %s710 = int_to_ptr.vmem [resolvable:$true] %s709
      %715 = dma.vmem_to_hbm [thread:$0]  %s710, 256, %s9, [#allocation4], 128, 128, 8
    $region65: #{tpu_custom_call.1} parent=1 // pred_fallthru
      _
    // Predicated region
    $region66: #{tpu_custom_call.1} parent=1 // pred_check
      _
    $region67: #{tpu_custom_call.1} parent=1 // pred_check_branch
      %717 = sbr.rel (0) target = $region69
    $region68: #{tpu_custom_call.1} parent=1 // pred_region
      %718 = dma.done [#allocation4], 256
    $region69: #{tpu_custom_call.1} parent=1 // pred_fallthru
      _
    %719 = vsyncpa [#allocation3], 1
    %720 = vsyncpa [#allocation6], 1
    %721 = vsyncpa [#allocation9], 1
    %722 = vsyncpa [#allocation12], 1
    %723 = vsyncpa [#allocation4], 1

</llo_original>
